<compile_context>
chip_gen: v5e
topology: v5e:2x2
jax: 0.10.0
libtpu: 0.0.40
codegen_flags: <defaults>
</compile_context>

<pallas_src>
import jax
import jax.numpy as jnp
from jax.experimental import pallas as pl
from jax.experimental.pallas import tpu as pltpu


_TAPS = tuple((dy, dx) for dy in range(3) for dx in range(3))


def _round_up(v, m):
    return ((v + m - 1) // m) * m


def _make_fusion_kernel(n_layers, B_blk, Wp, L_pad, A, Lx, cins_pad, couts_out):
    """Fused conv stack; one grid step processes B_blk packed samples."""

    def kernel(*refs):
        x_ref, mask_ref = refs[0], refs[1]
        w_refs = refs[2:2 + 2 * n_layers:2]
        b_refs = refs[3:2 + 2 * n_layers:2]
        o_ref = refs[2 + 2 * n_layers]
        scratch = refs[3 + 2 * n_layers:]
        im_refs = scratch[:n_layers]              # per-layer im2col buffers
        act_refs = scratch[n_layers:]             # intermediate activations

        mask = mask_ref[...]                      # (1, B_blk*L_pad) interior mask

        for l in range(n_layers):
            cin_l = cins_pad[l]
            im_ref = im_refs[l]

            # ---- im2col: stack the 9 shifted slices on sublanes so the whole
            # channel mix is a single MXU matmul with K = 9*Cin_pad.
            for t, (dy, dx) in enumerate(_TAPS):
                off = (dy - 1) * Wp + (dx - 1)
                r0 = t * cin_l                    # multiple of 8 (aligned store)
                for s in range(B_blk):
                    c0 = s * L_pad                # multiple of 128 (aligned store)
                    lo = A + off                  # static, in-bounds (A >= Wp+1)
                    if l == 0:
                        src = x_ref[s, :, lo:lo + L_pad]
                    else:
                        base = s * Lx + lo
                        src = act_refs[l - 1][:, base:base + L_pad]
                    im_ref[r0:r0 + cin_l, c0:c0 + L_pad] = src

            z = jnp.dot(w_refs[l][...], im_ref[...],
                        preferred_element_type=jnp.float32) + b_refs[l][...]

            if l < n_layers - 1:
                a_ref = act_refs[l]
                # Masked ReLU keeps pad columns / alignment tail exactly zero so
                # they act as the next layer's zero padding.
                a = jnp.maximum(z, 0.0) * mask
                zeros_slack = jnp.zeros((couts_out[l], A), jnp.float32)
                for s in range(B_blk):
                    base = s * Lx
                    # Interior: 128-aligned offset, 128-multiple length -> unmasked.
                    a_ref[:, base + A:base + A + L_pad] = a[:, s * L_pad:(s + 1) * L_pad]
                    # Re-write the per-sample zero halo every step (scratch is
                    # uninitialized / persistent; cheap aligned stores, megacore-safe).
                    a_ref[:, base:base + A] = zeros_slack
                    a_ref[:, base + A + L_pad:base + Lx] = zeros_slack
            else:
                # Sigmoid: exp + exact reciprocal (EUP path, no VPU divide).
                out = pl.reciprocal(1.0 + jnp.exp(-z), approx=False)
                for s in range(B_blk):
                    o_ref[s, :, :] = out[:, s * L_pad:(s + 1) * L_pad].astype(o_ref.dtype)

    return kernel


def fusion_forward(x: jax.Array, params, *, target_lanes=4096) -> jax.Array:
    """Forward pass of `Fusion`: [Conv3x3+ReLU]*(n-1) -> Conv3x3 -> Sigmoid.

    x: (N, Cin, H, W) NCHW.  params: list of (weight (Cout,Cin,3,3), bias (Cout,)).
    Returns (N, C_last, H, W), matching nn.Conv2d(k=3, s=1, p=1) semantics.
    """
    n_layers = len(params)
    N, Cin, H, W = x.shape
    c_last = int(params[-1][0].shape[0])

    Wp = W + 2                                   # width incl. the 2 zero pad columns
    L = H * Wp                                   # true flattened length
    L_pad = _round_up(L, 128)                    # stored length (unmasked stores)
    A = _round_up(Wp + 1, 128)                   # 128-aligned zero halo (>= Wp+1)
    Lx = A + L_pad + A                           # per-sample padded-flat stride

    # Pack samples onto the lane axis to amortize per-step overhead, but keep
    # >= 2 grid steps when N >= 2 so v7x megacore can shard the batch axis.
    B_blk = max(1, min(target_lanes // max(L_pad, 1), (N + 1) // 2))
    B_blk = min(B_blk, max(1, N))
    n_steps = -(-N // B_blk)
    N_pad = n_steps * B_blk

    # Channel counts padded to multiples of 8 -> aligned im2col sublane stores.
    cins_pad, couts_out = [], []
    cin_p = _round_up(Cin, 8)
    for l, (w, _) in enumerate(params):
        cins_pad.append(cin_p)
        cout = int(w.shape[0])
        cout_p = cout if l == n_layers - 1 else _round_up(cout, 8)
        couts_out.append(cout_p)
        cin_p = cout_p

    # Input: pad width by 1 (zeros), flatten, zero-extend to L_pad, add the A-lane
    # halo (supplies the H-direction zero padding).  Channels stay on sublanes.
    xw = jnp.pad(x.astype(jnp.float32),
                 ((0, N_pad - N), (0, cins_pad[0] - Cin), (0, 0), (1, 1)))
    x_flat = jnp.pad(xw.reshape(N_pad, cins_pad[0], L),
                     ((0, 0), (0, 0), (A, A + (L_pad - L))))

    # Interior mask: 1 on true output columns, 0 on pad columns / alignment tail.
    col = jnp.arange(Wp, dtype=jnp.int32)
    col_mask = ((col >= 1) & (col <= W)).astype(jnp.float32)
    m = jnp.pad(jnp.tile(col_mask, (H,)), (0, L_pad - L))
    mask = jnp.tile(m, (B_blk,)).reshape(1, B_blk * L_pad)

    in_specs = [
        pl.BlockSpec((B_blk, cins_pad[0], Lx), lambda g: (g, 0, 0)),
        pl.BlockSpec((1, B_blk * L_pad), lambda g: (0, 0)),
    ]
    args = [x_flat, mask]

    flops = 0
    for l, (w, b) in enumerate(params):
        cout, cin = int(w.shape[0]), int(w.shape[1])
        cin_p, cout_p = cins_pad[l], couts_out[l]
        # (Cout, Cin, 3, 3) -> (Cout_p, 9*Cin_p); K index = tap*Cin_p + channel.
        wt = jnp.transpose(w.astype(jnp.float32), (0, 2, 3, 1))       # (cout,3,3,cin)
        wt = jnp.pad(wt, ((0, cout_p - cout), (0, 0), (0, 0), (0, cin_p - cin)))
        w2d = wt.reshape(cout_p, 9 * cin_p)
        b2d = jnp.pad(b.astype(jnp.float32), (0, cout_p - cout)).reshape(cout_p, 1)
        in_specs.append(pl.BlockSpec((cout_p, 9 * cin_p), lambda g: (0, 0)))
        in_specs.append(pl.BlockSpec((cout_p, 1), lambda g: (0, 0)))
        args += [w2d, b2d]
        flops += 2 * N * H * W * 9 * cout * cin

    scratch_shapes = (
        [pltpu.VMEM((9 * cins_pad[l], B_blk * L_pad), jnp.float32)
         for l in range(n_layers)]
        + [pltpu.VMEM((couts_out[l], B_blk * Lx), jnp.float32)
           for l in range(n_layers - 1)]
    )

    kernel = _make_fusion_kernel(n_layers, B_blk, Wp, L_pad, A, Lx,
                                 tuple(cins_pad), tuple(couts_out))

    # Rough VMEM requirement with headroom (double-buffered I/O + weights + scratch).
    scratch_bytes = 4 * sum(9 * cins_pad[l] * B_blk * L_pad for l in range(n_layers))
    scratch_bytes += 4 * sum(couts_out[l] * B_blk * Lx for l in range(n_layers - 1))
    io_bytes = 4 * (2 * B_blk * cins_pad[0] * Lx + 2 * B_blk * c_last * L_pad
                    + B_blk * L_pad
                    + sum(cp * (9 * ci + 1) for cp, ci in zip(couts_out, cins_pad)))
    vmem_limit = int(min(100 * 2**20, max(32 * 2**20, 2 * (scratch_bytes + io_bytes))))

    bytes_accessed = int(4 * (x_flat.size + N_pad * c_last * L_pad
                              + sum(a.size for a in args[1:])))

    out_flat = pl.pallas_call(
        kernel,
        out_shape=jax.ShapeDtypeStruct((N_pad, c_last, L_pad), x.dtype),
        grid_spec=pltpu.PrefetchScalarGridSpec(
            num_scalar_prefetch=0,
            grid=(n_steps,),
            in_specs=in_specs,
            out_specs=pl.BlockSpec((B_blk, c_last, L_pad), lambda g: (g, 0, 0)),
            scratch_shapes=scratch_shapes,
        ),
        compiler_params=pltpu.CompilerParams(
            dimension_semantics=("parallel",),
            vmem_limit_bytes=vmem_limit,
        ),
        cost_estimate=pl.CostEstimate(
            flops=int(flops),
            transcendentals=int(N * H * W * c_last),
            bytes_accessed=bytes_accessed,
        ),
    )(*args)

    # (N_pad, C_last, L_pad) -> true samples / true length -> (H, W+2) -> drop pads.
    out = out_flat[:N, :, :L].reshape(N, c_last, H, Wp)[:, :, :, 1:W + 1]
    return out


def _reference_forward(x, params):
    """Pure-JAX reference (same math as the PyTorch Fusion module)."""
    y = x
    n = len(params)
    for idx, (w, b) in enumerate(params):
        y = jax.lax.conv_general_dilated(
            y, w, window_strides=(1, 1), padding=((1, 1), (1, 1)),
            dimension_numbers=("NCHW", "OIHW", "NCHW"),
            precision=jax.lax.Precision.HIGHEST)
        y = y + b.reshape(1, -1, 1, 1)
        y = jnp.maximum(y, 0.0) if idx < n - 1 else jax.nn.sigmoid(y)
    return y


if __name__ == "__main__":
    key = jax.random.PRNGKey(0)
    k = jax.random.split(key, 7)

    # Shapes consistent with the module: Fusion(in_chn=4, feature_chn=16, block_num=3)
    N, Cin, H, W = 2, 4, 16, 16
    feature_chn = 16
    x = jax.random.normal(k[0], (N, Cin, H, W), dtype=jnp.float32)

    def conv_init(kw, kb, cout, cin):
        # PyTorch Conv2d default init: U(+-1/sqrt(fan_in)), fan_in = cin*3*3.
        bound = 1.0 / ((cin * 9) ** 0.5)
        w = jax.random.uniform(kw, (cout, cin, 3, 3), jnp.float32, -bound, bound)
        b = jax.random.uniform(kb, (cout,), jnp.float32, -bound, bound)
        return w, b

    params = [
        conv_init(k[1], k[2], feature_chn, Cin),          # Conv(4->16)  + ReLU
        conv_init(k[3], k[4], feature_chn, feature_chn),  # Conv(16->16) + ReLU
        conv_init(k[5], k[6], 1, feature_chn),            # Conv(16->1)  + Sigmoid
    ]

    out = fusion_forward(x, params)
    jax.block_until_ready(out)

    ref = _reference_forward(x, params)
    assert out.shape == (N, 1, H, W), out.shape
    err = float(jnp.max(jnp.abs(out - ref)))
    assert err < 1e-4, f"max abs err {err}"
    print("KERNEL_OK")
</pallas_src>

<mosaic_0001>
module attributes {stable_mosaic.version = 11 : i64} {
  func.func @kernel(%arg0: i32, %arg1: memref<1x8x640xf32, #tpu.memory_space<vmem>>, %arg2: memref<1x384xf32, #tpu.memory_space<vmem>>, %arg3: memref<16x72xf32, #tpu.memory_space<vmem>>, %arg4: memref<16x1xf32, #tpu.memory_space<vmem>>, %arg5: memref<16x144xf32, #tpu.memory_space<vmem>>, %arg6: memref<16x1xf32, #tpu.memory_space<vmem>>, %arg7: memref<1x144xf32, #tpu.memory_space<vmem>>, %arg8: memref<1x1xf32, #tpu.memory_space<vmem>>, %arg9: memref<1x1x384xf32, #tpu.memory_space<vmem>>, %arg10: memref<72x384xf32, #tpu.memory_space<vmem>>, %arg11: memref<144x384xf32, #tpu.memory_space<vmem>>, %arg12: memref<144x384xf32, #tpu.memory_space<vmem>>, %arg13: memref<16x640xf32, #tpu.memory_space<vmem>>, %arg14: memref<16x640xf32, #tpu.memory_space<vmem>>) attributes {dimension_semantics = [#tpu.dimension_semantics<parallel>], iteration_bounds = array<i64: 2>, scalar_prefetch = 0 : i64, scratch_operands = 5 : i64, tpu.core_type = #tpu.core_type<tc>, window_params = [{transform_indices = @transform_0, window_bounds = array<i64: 1, 8, 640>}, {pipeline_mode = #tpu.pipeline_mode<synchronous>, transform_indices = @transform_1, window_bounds = array<i64: 1, 384>}, {pipeline_mode = #tpu.pipeline_mode<synchronous>, transform_indices = @transform_2, window_bounds = array<i64: 16, 72>}, {pipeline_mode = #tpu.pipeline_mode<synchronous>, transform_indices = @transform_3, window_bounds = array<i64: 16, 1>}, {pipeline_mode = #tpu.pipeline_mode<synchronous>, transform_indices = @transform_4, window_bounds = array<i64: 16, 144>}, {pipeline_mode = #tpu.pipeline_mode<synchronous>, transform_indices = @transform_5, window_bounds = array<i64: 16, 1>}, {pipeline_mode = #tpu.pipeline_mode<synchronous>, transform_indices = @transform_6, window_bounds = array<i64: 1, 144>}, {pipeline_mode = #tpu.pipeline_mode<synchronous>, transform_indices = @transform_7, window_bounds = array<i64: 1, 1>}, {transform_indices = @transform_8, window_bounds = array<i64: 1, 1, 384>}]} {
    %c0 = arith.constant 0 : index
    %c0_0 = arith.constant 0 : index
    %0 = vector.load %arg2[%c0, %c0_0] : memref<1x384xf32, #tpu.memory_space<vmem>>, vector<1x384xf32>
    %c0_1 = arith.constant 0 : index
    %c0_2 = arith.constant 0 : index
    %c109 = arith.constant 109 : index
    %1 = vector.load %arg1[%c0_1, %c0_2, %c109] : memref<1x8x640xf32, #tpu.memory_space<vmem>>, vector<1x8x384xf32>
    %2 = vector.shape_cast %1 : vector<1x8x384xf32> to vector<8x384xf32>
    %c0_3 = arith.constant 0 : index
    %c0_4 = arith.constant 0 : index
    %3 = vector.load %arg10[%c0_3, %c0_4] : memref<72x384xf32, #tpu.memory_space<vmem>>, vector<8x384xf32>
    tpu.vector_store %arg10[%c0_3, %c0_4], %2 {strides = array<i32>} : memref<72x384xf32, #tpu.memory_space<vmem>>, vector<8x384xf32>,
    %c0_5 = arith.constant 0 : index
    %c0_6 = arith.constant 0 : index
    %c110 = arith.constant 110 : index
    %4 = vector.load %arg1[%c0_5, %c0_6, %c110] : memref<1x8x640xf32, #tpu.memory_space<vmem>>, vector<1x8x384xf32>
    %5 = vector.shape_cast %4 : vector<1x8x384xf32> to vector<8x384xf32>
    %c8 = arith.constant 8 : index
    %c0_7 = arith.constant 0 : index
    %6 = vector.load %arg10[%c8, %c0_7] : memref<72x384xf32, #tpu.memory_space<vmem>>, vector<8x384xf32>
    tpu.vector_store %arg10[%c8, %c0_7], %5 {strides = array<i32>} : memref<72x384xf32, #tpu.memory_space<vmem>>, vector<8x384xf32>,
    %c0_8 = arith.constant 0 : index
    %c0_9 = arith.constant 0 : index
    %c111 = arith.constant 111 : index
    %7 = vector.load %arg1[%c0_8, %c0_9, %c111] : memref<1x8x640xf32, #tpu.memory_space<vmem>>, vector<1x8x384xf32>
    %8 = vector.shape_cast %7 : vector<1x8x384xf32> to vector<8x384xf32>
    %c16 = arith.constant 16 : index
    %c0_10 = arith.constant 0 : index
    %9 = vector.load %arg10[%c16, %c0_10] : memref<72x384xf32, #tpu.memory_space<vmem>>, vector<8x384xf32>
    tpu.vector_store %arg10[%c16, %c0_10], %8 {strides = array<i32>} : memref<72x384xf32, #tpu.memory_space<vmem>>, vector<8x384xf32>,
    %c0_11 = arith.constant 0 : index
    %c0_12 = arith.constant 0 : index
    %c127 = arith.constant 127 : index
    %10 = vector.load %arg1[%c0_11, %c0_12, %c127] : memref<1x8x640xf32, #tpu.memory_space<vmem>>, vector<1x8x384xf32>
    %11 = vector.shape_cast %10 : vector<1x8x384xf32> to vector<8x384xf32>
    %c24 = arith.constant 24 : index
    %c0_13 = arith.constant 0 : index
    %12 = vector.load %arg10[%c24, %c0_13] : memref<72x384xf32, #tpu.memory_space<vmem>>, vector<8x384xf32>
    tpu.vector_store %arg10[%c24, %c0_13], %11 {strides = array<i32>} : memref<72x384xf32, #tpu.memory_space<vmem>>, vector<8x384xf32>,
    %c0_14 = arith.constant 0 : index
    %c0_15 = arith.constant 0 : index
    %c128 = arith.constant 128 : index
    %13 = vector.load %arg1[%c0_14, %c0_15, %c128] : memref<1x8x640xf32, #tpu.memory_space<vmem>>, vector<1x8x384xf32>
    %14 = vector.shape_cast %13 : vector<1x8x384xf32> to vector<8x384xf32>
    %c32 = arith.constant 32 : index
    %c0_16 = arith.constant 0 : index
    %15 = vector.load %arg10[%c32, %c0_16] : memref<72x384xf32, #tpu.memory_space<vmem>>, vector<8x384xf32>
    tpu.vector_store %arg10[%c32, %c0_16], %14 {strides = array<i32>} : memref<72x384xf32, #tpu.memory_space<vmem>>, vector<8x384xf32>,
    %c0_17 = arith.constant 0 : index
    %c0_18 = arith.constant 0 : index
    %c129 = arith.constant 129 : index
    %16 = vector.load %arg1[%c0_17, %c0_18, %c129] : memref<1x8x640xf32, #tpu.memory_space<vmem>>, vector<1x8x384xf32>
    %17 = vector.shape_cast %16 : vector<1x8x384xf32> to vector<8x384xf32>
    %c40 = arith.constant 40 : index
    %c0_19 = arith.constant 0 : index
    %18 = vector.load %arg10[%c40, %c0_19] : memref<72x384xf32, #tpu.memory_space<vmem>>, vector<8x384xf32>
    tpu.vector_store %arg10[%c40, %c0_19], %17 {strides = array<i32>} : memref<72x384xf32, #tpu.memory_space<vmem>>, vector<8x384xf32>,
    %c0_20 = arith.constant 0 : index
    %c0_21 = arith.constant 0 : index
    %c145 = arith.constant 145 : index
    %19 = vector.load %arg1[%c0_20, %c0_21, %c145] : memref<1x8x640xf32, #tpu.memory_space<vmem>>, vector<1x8x384xf32>
    %20 = vector.shape_cast %19 : vector<1x8x384xf32> to vector<8x384xf32>
    %c48 = arith.constant 48 : index
    %c0_22 = arith.constant 0 : index
    %21 = vector.load %arg10[%c48, %c0_22] : memref<72x384xf32, #tpu.memory_space<vmem>>, vector<8x384xf32>
    tpu.vector_store %arg10[%c48, %c0_22], %20 {strides = array<i32>} : memref<72x384xf32, #tpu.memory_space<vmem>>, vector<8x384xf32>,
    %c0_23 = arith.constant 0 : index
    %c0_24 = arith.constant 0 : index
    %c146 = arith.constant 146 : index
    %22 = vector.load %arg1[%c0_23, %c0_24, %c146] : memref<1x8x640xf32, #tpu.memory_space<vmem>>, vector<1x8x384xf32>
    %23 = vector.shape_cast %22 : vector<1x8x384xf32> to vector<8x384xf32>
    %c56 = arith.constant 56 : index
    %c0_25 = arith.constant 0 : index
    %24 = vector.load %arg10[%c56, %c0_25] : memref<72x384xf32, #tpu.memory_space<vmem>>, vector<8x384xf32>
    tpu.vector_store %arg10[%c56, %c0_25], %23 {strides = array<i32>} : memref<72x384xf32, #tpu.memory_space<vmem>>, vector<8x384xf32>,
    %c0_26 = arith.constant 0 : index
    %c0_27 = arith.constant 0 : index
    %c147 = arith.constant 147 : index
    %25 = vector.load %arg1[%c0_26, %c0_27, %c147] : memref<1x8x640xf32, #tpu.memory_space<vmem>>, vector<1x8x384xf32>
    %26 = vector.shape_cast %25 : vector<1x8x384xf32> to vector<8x384xf32>
    %c64 = arith.constant 64 : index
    %c0_28 = arith.constant 0 : index
    %27 = vector.load %arg10[%c64, %c0_28] : memref<72x384xf32, #tpu.memory_space<vmem>>, vector<8x384xf32>
    tpu.vector_store %arg10[%c64, %c0_28], %26 {strides = array<i32>} : memref<72x384xf32, #tpu.memory_space<vmem>>, vector<8x384xf32>,
    %c0_29 = arith.constant 0 : index
    %c0_30 = arith.constant 0 : index
    %28 = vector.load %arg3[%c0_29, %c0_30] : memref<16x72xf32, #tpu.memory_space<vmem>>, vector<16x72xf32>
    %c0_31 = arith.constant 0 : index
    %c0_32 = arith.constant 0 : index
    %29 = vector.load %arg10[%c0_31, %c0_32] : memref<72x384xf32, #tpu.memory_space<vmem>>, vector<72x384xf32>
    %cst = arith.constant dense<0.000000e+00> : vector<16x384xf32>
    %30 = tpu.matmul %28, %29, %cst {dimension_numbers = #tpu.dot_dimension_numbers<[1], [0], [0], [1], [0, 0, 1, 1], [], []>} : vector<16x72xf32>, vector<72x384xf32>, vector<16x384xf32> -> vector<16x384xf32>
    %c0_33 = arith.constant 0 : index
    %c0_34 = arith.constant 0 : index
    %31 = vector.load %arg4[%c0_33, %c0_34] : memref<16x1xf32, #tpu.memory_space<vmem>>, vector<16x1xf32>
    %32 = vector.broadcast %31 : vector<16x1xf32> to vector<16x384xf32>
    %33 = arith.addf %30, %32 : vector<16x384xf32>
    %cst_35 = arith.constant 0.000000e+00 : f32
    %34 = vector.broadcast %cst_35 : f32 to vector<16x384xf32>
    %35 = arith.maximumf %33, %34 : vector<16x384xf32>
    %36 = vector.broadcast %0 : vector<1x384xf32> to vector<16x384xf32>
    %37 = arith.mulf %35, %36 : vector<16x384xf32>
    %cst_36 = arith.constant 0.000000e+00 : f32
    %38 = vector.broadcast %cst_36 : f32 to vector<16x128xf32>
    %c0_37 = arith.constant 0 : index
    %c128_38 = arith.constant 128 : index
    %39 = vector.load %arg13[%c0_37, %c128_38] : memref<16x640xf32, #tpu.memory_space<vmem>>, vector<16x384xf32>
    tpu.vector_store %arg13[%c0_37, %c128_38], %37 {strides = array<i32>} : memref<16x640xf32, #tpu.memory_space<vmem>>, vector<16x384xf32>,
    %c0_39 = arith.constant 0 : index
    %c0_40 = arith.constant 0 : index
    %40 = vector.load %arg13[%c0_39, %c0_40] : memref<16x640xf32, #tpu.memory_space<vmem>>, vector<16x128xf32>
    tpu.vector_store %arg13[%c0_39, %c0_40], %38 {strides = array<i32>} : memref<16x640xf32, #tpu.memory_space<vmem>>, vector<16x128xf32>,
    %c0_41 = arith.constant 0 : index
    %c512 = arith.constant 512 : index
    %41 = vector.load %arg13[%c0_41, %c512] : memref<16x640xf32, #tpu.memory_space<vmem>>, vector<16x128xf32>
    tpu.vector_store %arg13[%c0_41, %c512], %38 {strides = array<i32>} : memref<16x640xf32, #tpu.memory_space<vmem>>, vector<16x128xf32>,
    %c0_42 = arith.constant 0 : index
    %c109_43 = arith.constant 109 : index
    %42 = vector.load %arg13[%c0_42, %c109_43] : memref<16x640xf32, #tpu.memory_space<vmem>>, vector<16x384xf32>
    %c0_44 = arith.constant 0 : index
    %c0_45 = arith.constant 0 : index
    %43 = vector.load %arg11[%c0_44, %c0_45] : memref<144x384xf32, #tpu.memory_space<vmem>>, vector<16x384xf32>
    tpu.vector_store %arg11[%c0_44, %c0_45], %42 {strides = array<i32>} : memref<144x384xf32, #tpu.memory_space<vmem>>, vector<16x384xf32>,
    %c0_46 = arith.constant 0 : index
    %c110_47 = arith.constant 110 : index
    %44 = vector.load %arg13[%c0_46, %c110_47] : memref<16x640xf32, #tpu.memory_space<vmem>>, vector<16x384xf32>
    %c16_48 = arith.constant 16 : index
    %c0_49 = arith.constant 0 : index
    %45 = vector.load %arg11[%c16_48, %c0_49] : memref<144x384xf32, #tpu.memory_space<vmem>>, vector<16x384xf32>
    tpu.vector_store %arg11[%c16_48, %c0_49], %44 {strides = array<i32>} : memref<144x384xf32, #tpu.memory_space<vmem>>, vector<16x384xf32>,
    %c0_50 = arith.constant 0 : index
    %c111_51 = arith.constant 111 : index
    %46 = vector.load %arg13[%c0_50, %c111_51] : memref<16x640xf32, #tpu.memory_space<vmem>>, vector<16x384xf32>
    %c32_52 = arith.constant 32 : index
    %c0_53 = arith.constant 0 : index
    %47 = vector.load %arg11[%c32_52, %c0_53] : memref<144x384xf32, #tpu.memory_space<vmem>>, vector<16x384xf32>
    tpu.vector_store %arg11[%c32_52, %c0_53], %46 {strides = array<i32>} : memref<144x384xf32, #tpu.memory_space<vmem>>, vector<16x384xf32>,
    %c0_54 = arith.constant 0 : index
    %c127_55 = arith.constant 127 : index
    %48 = vector.load %arg13[%c0_54, %c127_55] : memref<16x640xf32, #tpu.memory_space<vmem>>, vector<16x384xf32>
    %c48_56 = arith.constant 48 : index
    %c0_57 = arith.constant 0 : index
    %49 = vector.load %arg11[%c48_56, %c0_57] : memref<144x384xf32, #tpu.memory_space<vmem>>, vector<16x384xf32>
    tpu.vector_store %arg11[%c48_56, %c0_57], %48 {strides = array<i32>} : memref<144x384xf32, #tpu.memory_space<vmem>>, vector<16x384xf32>,
    %c0_58 = arith.constant 0 : index
    %c128_59 = arith.constant 128 : index
    %50 = vector.load %arg13[%c0_58, %c128_59] : memref<16x640xf32, #tpu.memory_space<vmem>>, vector<16x384xf32>
    %c64_60 = arith.constant 64 : index
    %c0_61 = arith.constant 0 : index
    %51 = vector.load %arg11[%c64_60, %c0_61] : memref<144x384xf32, #tpu.memory_space<vmem>>, vector<16x384xf32>
    tpu.vector_store %arg11[%c64_60, %c0_61], %50 {strides = array<i32>} : memref<144x384xf32, #tpu.memory_space<vmem>>, vector<16x384xf32>,
    %c0_62 = arith.constant 0 : index
    %c129_63 = arith.constant 129 : index
    %52 = vector.load %arg13[%c0_62, %c129_63] : memref<16x640xf32, #tpu.memory_space<vmem>>, vector<16x384xf32>
    %c80 = arith.constant 80 : index
    %c0_64 = arith.constant 0 : index
    %53 = vector.load %arg11[%c80, %c0_64] : memref<144x384xf32, #tpu.memory_space<vmem>>, vector<16x384xf32>
    tpu.vector_store %arg11[%c80, %c0_64], %52 {strides = array<i32>} : memref<144x384xf32, #tpu.memory_space<vmem>>, vector<16x384xf32>,
    %c0_65 = arith.constant 0 : index
    %c145_66 = arith.constant 145 : index
    %54 = vector.load %arg13[%c0_65, %c145_66] : memref<16x640xf32, #tpu.memory_space<vmem>>, vector<16x384xf32>
    %c96 = arith.constant 96 : index
    %c0_67 = arith.constant 0 : index
    %55 = vector.load %arg11[%c96, %c0_67] : memref<144x384xf32, #tpu.memory_space<vmem>>, vector<16x384xf32>
    tpu.vector_store %arg11[%c96, %c0_67], %54 {strides = array<i32>} : memref<144x384xf32, #tpu.memory_space<vmem>>, vector<16x384xf32>,
    %c0_68 = arith.constant 0 : index
    %c146_69 = arith.constant 146 : index
    %56 = vector.load %arg13[%c0_68, %c146_69] : memref<16x640xf32, #tpu.memory_space<vmem>>, vector<16x384xf32>
    %c112 = arith.constant 112 : index
    %c0_70 = arith.constant 0 : index
    %57 = vector.load %arg11[%c112, %c0_70] : memref<144x384xf32, #tpu.memory_space<vmem>>, vector<16x384xf32>
    tpu.vector_store %arg11[%c112, %c0_70], %56 {strides = array<i32>} : memref<144x384xf32, #tpu.memory_space<vmem>>, vector<16x384xf32>,
    %c0_71 = arith.constant 0 : index
    %c147_72 = arith.constant 147 : index
    %58 = vector.load %arg13[%c0_71, %c147_72] : memref<16x640xf32, #tpu.memory_space<vmem>>, vector<16x384xf32>
    %c128_73 = arith.constant 128 : index
    %c0_74 = arith.constant 0 : index
    %59 = vector.load %arg11[%c128_73, %c0_74] : memref<144x384xf32, #tpu.memory_space<vmem>>, vector<16x384xf32>
    tpu.vector_store %arg11[%c128_73, %c0_74], %58 {strides = array<i32>} : memref<144x384xf32, #tpu.memory_space<vmem>>, vector<16x384xf32>,
    %c0_75 = arith.constant 0 : index
    %c0_76 = arith.constant 0 : index
    %60 = vector.load %arg5[%c0_75, %c0_76] : memref<16x144xf32, #tpu.memory_space<vmem>>, vector<16x144xf32>
    %c0_77 = arith.constant 0 : index
    %c0_78 = arith.constant 0 : index
    %61 = vector.load %arg11[%c0_77, %c0_78] : memref<144x384xf32, #tpu.memory_space<vmem>>, vector<144x384xf32>
    %cst_79 = arith.constant dense<0.000000e+00> : vector<16x384xf32>
    %62 = tpu.matmul %60, %61, %cst_79 {dimension_numbers = #tpu.dot_dimension_numbers<[1], [0], [0], [1], [0, 0, 1, 1], [], []>} : vector<16x144xf32>, vector<144x384xf32>, vector<16x384xf32> -> vector<16x384xf32>
    %c0_80 = arith.constant 0 : index
    %c0_81 = arith.constant 0 : index
    %63 = vector.load %arg6[%c0_80, %c0_81] : memref<16x1xf32, #tpu.memory_space<vmem>>, vector<16x1xf32>
    %64 = vector.broadcast %63 : vector<16x1xf32> to vector<16x384xf32>
    %65 = arith.addf %62, %64 : vector<16x384xf32>
    %cst_82 = arith.constant 0.000000e+00 : f32
    %66 = vector.broadcast %cst_82 : f32 to vector<16x384xf32>
    %67 = arith.maximumf %65, %66 : vector<16x384xf32>
    %68 = vector.broadcast %0 : vector<1x384xf32> to vector<16x384xf32>
    %69 = arith.mulf %67, %68 : vector<16x384xf32>
    %cst_83 = arith.constant 0.000000e+00 : f32
    %70 = vector.broadcast %cst_83 : f32 to vector<16x128xf32>
    %c0_84 = arith.constant 0 : index
    %c128_85 = arith.constant 128 : index
    %71 = vector.load %arg14[%c0_84, %c128_85] : memref<16x640xf32, #tpu.memory_space<vmem>>, vector<16x384xf32>
    tpu.vector_store %arg14[%c0_84, %c128_85], %69 {strides = array<i32>} : memref<16x640xf32, #tpu.memory_space<vmem>>, vector<16x384xf32>,
    %c0_86 = arith.constant 0 : index
    %c0_87 = arith.constant 0 : index
    %72 = vector.load %arg14[%c0_86, %c0_87] : memref<16x640xf32, #tpu.memory_space<vmem>>, vector<16x128xf32>
    tpu.vector_store %arg14[%c0_86, %c0_87], %70 {strides = array<i32>} : memref<16x640xf32, #tpu.memory_space<vmem>>, vector<16x128xf32>,
    %c0_88 = arith.constant 0 : index
    %c512_89 = arith.constant 512 : index
    %73 = vector.load %arg14[%c0_88, %c512_89] : memref<16x640xf32, #tpu.memory_space<vmem>>, vector<16x128xf32>
    tpu.vector_store %arg14[%c0_88, %c512_89], %70 {strides = array<i32>} : memref<16x640xf32, #tpu.memory_space<vmem>>, vector<16x128xf32>,
    %c0_90 = arith.constant 0 : index
    %c109_91 = arith.constant 109 : index
    %74 = vector.load %arg14[%c0_90, %c109_91] : memref<16x640xf32, #tpu.memory_space<vmem>>, vector<16x384xf32>
    %c0_92 = arith.constant 0 : index
    %c0_93 = arith.constant 0 : index
    %75 = vector.load %arg12[%c0_92, %c0_93] : memref<144x384xf32, #tpu.memory_space<vmem>>, vector<16x384xf32>
    tpu.vector_store %arg12[%c0_92, %c0_93], %74 {strides = array<i32>} : memref<144x384xf32, #tpu.memory_space<vmem>>, vector<16x384xf32>,
    %c0_94 = arith.constant 0 : index
    %c110_95 = arith.constant 110 : index
    %76 = vector.load %arg14[%c0_94, %c110_95] : memref<16x640xf32, #tpu.memory_space<vmem>>, vector<16x384xf32>
    %c16_96 = arith.constant 16 : index
    %c0_97 = arith.constant 0 : index
    %77 = vector.load %arg12[%c16_96, %c0_97] : memref<144x384xf32, #tpu.memory_space<vmem>>, vector<16x384xf32>
    tpu.vector_store %arg12[%c16_96, %c0_97], %76 {strides = array<i32>} : memref<144x384xf32, #tpu.memory_space<vmem>>, vector<16x384xf32>,
    %c0_98 = arith.constant 0 : index
    %c111_99 = arith.constant 111 : index
    %78 = vector.load %arg14[%c0_98, %c111_99] : memref<16x640xf32, #tpu.memory_space<vmem>>, vector<16x384xf32>
    %c32_100 = arith.constant 32 : index
    %c0_101 = arith.constant 0 : index
    %79 = vector.load %arg12[%c32_100, %c0_101] : memref<144x384xf32, #tpu.memory_space<vmem>>, vector<16x384xf32>
    tpu.vector_store %arg12[%c32_100, %c0_101], %78 {strides = array<i32>} : memref<144x384xf32, #tpu.memory_space<vmem>>, vector<16x384xf32>,
    %c0_102 = arith.constant 0 : index
    %c127_103 = arith.constant 127 : index
    %80 = vector.load %arg14[%c0_102, %c127_103] : memref<16x640xf32, #tpu.memory_space<vmem>>, vector<16x384xf32>
    %c48_104 = arith.constant 48 : index
    %c0_105 = arith.constant 0 : index
    %81 = vector.load %arg12[%c48_104, %c0_105] : memref<144x384xf32, #tpu.memory_space<vmem>>, vector<16x384xf32>
    tpu.vector_store %arg12[%c48_104, %c0_105], %80 {strides = array<i32>} : memref<144x384xf32, #tpu.memory_space<vmem>>, vector<16x384xf32>,
    %c0_106 = arith.constant 0 : index
    %c128_107 = arith.constant 128 : index
    %82 = vector.load %arg14[%c0_106, %c128_107] : memref<16x640xf32, #tpu.memory_space<vmem>>, vector<16x384xf32>
    %c64_108 = arith.constant 64 : index
    %c0_109 = arith.constant 0 : index
    %83 = vector.load %arg12[%c64_108, %c0_109] : memref<144x384xf32, #tpu.memory_space<vmem>>, vector<16x384xf32>
    tpu.vector_store %arg12[%c64_108, %c0_109], %82 {strides = array<i32>} : memref<144x384xf32, #tpu.memory_space<vmem>>, vector<16x384xf32>,
    %c0_110 = arith.constant 0 : index
    %c129_111 = arith.constant 129 : index
    %84 = vector.load %arg14[%c0_110, %c129_111] : memref<16x640xf32, #tpu.memory_space<vmem>>, vector<16x384xf32>
    %c80_112 = arith.constant 80 : index
    %c0_113 = arith.constant 0 : index
    %85 = vector.load %arg12[%c80_112, %c0_113] : memref<144x384xf32, #tpu.memory_space<vmem>>, vector<16x384xf32>
    tpu.vector_store %arg12[%c80_112, %c0_113], %84 {strides = array<i32>} : memref<144x384xf32, #tpu.memory_space<vmem>>, vector<16x384xf32>,
    %c0_114 = arith.constant 0 : index
    %c145_115 = arith.constant 145 : index
    %86 = vector.load %arg14[%c0_114, %c145_115] : memref<16x640xf32, #tpu.memory_space<vmem>>, vector<16x384xf32>
    %c96_116 = arith.constant 96 : index
    %c0_117 = arith.constant 0 : index
    %87 = vector.load %arg12[%c96_116, %c0_117] : memref<144x384xf32, #tpu.memory_space<vmem>>, vector<16x384xf32>
    tpu.vector_store %arg12[%c96_116, %c0_117], %86 {strides = array<i32>} : memref<144x384xf32, #tpu.memory_space<vmem>>, vector<16x384xf32>,
    %c0_118 = arith.constant 0 : index
    %c146_119 = arith.constant 146 : index
    %88 = vector.load %arg14[%c0_118, %c146_119] : memref<16x640xf32, #tpu.memory_space<vmem>>, vector<16x384xf32>
    %c112_120 = arith.constant 112 : index
    %c0_121 = arith.constant 0 : index
    %89 = vector.load %arg12[%c112_120, %c0_121] : memref<144x384xf32, #tpu.memory_space<vmem>>, vector<16x384xf32>
    tpu.vector_store %arg12[%c112_120, %c0_121], %88 {strides = array<i32>} : memref<144x384xf32, #tpu.memory_space<vmem>>, vector<16x384xf32>,
    %c0_122 = arith.constant 0 : index
    %c147_123 = arith.constant 147 : index
    %90 = vector.load %arg14[%c0_122, %c147_123] : memref<16x640xf32, #tpu.memory_space<vmem>>, vector<16x384xf32>
    %c128_124 = arith.constant 128 : index
    %c0_125 = arith.constant 0 : index
    %91 = vector.load %arg12[%c128_124, %c0_125] : memref<144x384xf32, #tpu.memory_space<vmem>>, vector<16x384xf32>
    tpu.vector_store %arg12[%c128_124, %c0_125], %90 {strides = array<i32>} : memref<144x384xf32, #tpu.memory_space<vmem>>, vector<16x384xf32>,
    %c0_126 = arith.constant 0 : index
    %c0_127 = arith.constant 0 : index
    %92 = vector.load %arg7[%c0_126, %c0_127] : memref<1x144xf32, #tpu.memory_space<vmem>>, vector<1x144xf32>
    %c0_128 = arith.constant 0 : index
    %c0_129 = arith.constant 0 : index
    %93 = vector.load %arg12[%c0_128, %c0_129] : memref<144x384xf32, #tpu.memory_space<vmem>>, vector<144x384xf32>
    %cst_130 = arith.constant dense<0.000000e+00> : vector<1x384xf32>
    %94 = tpu.matmul %92, %93, %cst_130 {dimension_numbers = #tpu.dot_dimension_numbers<[1], [0], [0], [1], [0, 0, 1, 1], [], []>} : vector<1x144xf32>, vector<144x384xf32>, vector<1x384xf32> -> vector<1x384xf32>
    %c0_131 = arith.constant 0 : index
    %c0_132 = arith.constant 0 : index
    %95 = vector.load %arg8[%c0_131, %c0_132] : memref<1x1xf32, #tpu.memory_space<vmem>>, vector<1x1xf32>
    %96 = vector.broadcast %95 : vector<1x1xf32> to vector<1x384xf32>
    %97 = arith.addf %94, %96 : vector<1x384xf32>
    %cst_133 = arith.constant 0.000000e+00 : f32
    %98 = vector.broadcast %cst_133 : f32 to vector<1x384xf32>
    %99 = arith.subf %98, %97 : vector<1x384xf32>
    %100 = math.exp %99 : vector<1x384xf32>
    %cst_134 = arith.constant 1.000000e+00 : f32
    %101 = vector.broadcast %cst_134 : f32 to vector<1x384xf32>
    %102 = arith.addf %101, %100 : vector<1x384xf32>
    %103 = tpu.reciprocal %102 : vector<1x384xf32> -> vector<1x384xf32>
    %c0_135 = arith.constant 0 : index
    %c0_136 = arith.constant 0 : index
    %c0_137 = arith.constant 0 : index
    %104 = vector.load %arg9[%c0_135, %c0_136, %c0_137] : memref<1x1x384xf32, #tpu.memory_space<vmem>>, vector<1x1x384xf32>
    %105 = vector.shape_cast %104 : vector<1x1x384xf32> to vector<1x384xf32>
    %106 = vector.shape_cast %103 : vector<1x384xf32> to vector<1x1x384xf32>
    tpu.vector_store %arg9[%c0_135, %c0_136, %c0_137], %106 {strides = array<i32>} : memref<1x1x384xf32, #tpu.memory_space<vmem>>, vector<1x1x384xf32>,
    return
  }
  func.func @transform_0(%arg0: i32) -> (i32, i32, i32) {
    %c0_i32 = arith.constant 0 : i32
    %c0_i32_0 = arith.constant 0 : i32
    %c0_i32_1 = arith.constant 0 : i32
    return %arg0, %c0_i32, %c0_i32_0 : i32, i32, i32
  }
  func.func @transform_1(%arg0: i32) -> (i32, i32) {
    %c0_i32 = arith.constant 0 : i32
    %c0_i32_0 = arith.constant 0 : i32
    %c0_i32_1 = arith.constant 0 : i32
    return %c0_i32, %c0_i32_0 : i32, i32
  }
  func.func @transform_2(%arg0: i32) -> (i32, i32) {
    %c0_i32 = arith.constant 0 : i32
    %c0_i32_0 = arith.constant 0 : i32
    %c0_i32_1 = arith.constant 0 : i32
    return %c0_i32, %c0_i32_0 : i32, i32
  }
  func.func @transform_3(%arg0: i32) -> (i32, i32) {
    %c0_i32 = arith.constant 0 : i32
    %c0_i32_0 = arith.constant 0 : i32
    %c0_i32_1 = arith.constant 0 : i32
    return %c0_i32, %c0_i32_0 : i32, i32
  }
  func.func @transform_4(%arg0: i32) -> (i32, i32) {
    %c0_i32 = arith.constant 0 : i32
    %c0_i32_0 = arith.constant 0 : i32
    %c0_i32_1 = arith.constant 0 : i32
    return %c0_i32, %c0_i32_0 : i32, i32
  }
  func.func @transform_5(%arg0: i32) -> (i32, i32) {
    %c0_i32 = arith.constant 0 : i32
    %c0_i32_0 = arith.constant 0 : i32
    %c0_i32_1 = arith.constant 0 : i32
    return %c0_i32, %c0_i32_0 : i32, i32
  }
  func.func @transform_6(%arg0: i32) -> (i32, i32) {
    %c0_i32 = arith.constant 0 : i32
    %c0_i32_0 = arith.constant 0 : i32
    %c0_i32_1 = arith.constant 0 : i32
    return %c0_i32, %c0_i32_0 : i32, i32
  }
  func.func @transform_7(%arg0: i32) -> (i32, i32) {
    %c0_i32 = arith.constant 0 : i32
    %c0_i32_0 = arith.constant 0 : i32
    %c0_i32_1 = arith.constant 0 : i32
    return %c0_i32, %c0_i32_0 : i32, i32
  }
  func.func @transform_8(%arg0: i32) -> (i32, i32, i32) {
    %c0_i32 = arith.constant 0 : i32
    %c0_i32_0 = arith.constant 0 : i32
    %c0_i32_1 = arith.constant 0 : i32
    return %arg0, %c0_i32, %c0_i32_0 : i32, i32, i32
  }
}

</mosaic_0001>

<llo_original>
// kernel: tpu_custom_call.1
$region0: #{tpu_custom_call.1}
  #allocation0 [shape = 'u32[]', space=smem, size = 0x4, offset = 0x4, fixed_abs, tag = 'smem constant byte address 0x4 - core index']
  #allocation1 [shape = 'u32[72,128]{1,0:T(1,128)}', space=vmem, size = 0x9000, scoped, tag = 'internal scratch']
  #allocation2 [shape = 'f32[72,384]{1,0:T(8,128)}', space=vmem, size = 0x1b000, scoped, tag = 'scratch operand']
  #allocation3 [shape = 'f32[144,384]{1,0:T(8,128)}', space=vmem, size = 0x36000, scoped, tag = 'scratch operand']
  #allocation4 [shape = 'f32[144,384]{1,0:T(8,128)}', space=vmem, size = 0x36000, scoped, tag = 'scratch operand']
  #allocation5 [shape = 'f32[16,640]{1,0:T(8,128)}', space=vmem, size = 0xa000, scoped, tag = 'scratch operand']
  #allocation6 [shape = 'f32[16,640]{1,0:T(8,128)}', space=vmem, size = 0xa000, scoped, tag = 'scratch operand']
  #allocation7 [shape = 'f32[1,1]{1,0:T(1,128)S(1)}', space=vmem, size = 0x200, scoped, tag = 'scoped memory for tpu_custom_call.1']
  %s0 = inlined_call_operand.hbm [shape: f32[2,8,640], index: 0, kind: input, shape index: {}]
  %s1 = inlined_call_operand.vmem [shape: f32[1,384], index: 1, kind: input, shape index: {}]
  %s2 = inlined_call_operand.hbm [shape: f32[16,72], index: 2, kind: input, shape index: {}]
  %s3 = inlined_call_operand.vmem [shape: f32[16,1], index: 3, kind: input, shape index: {}]
  %s4 = inlined_call_operand.vmem [shape: f32[16,144], index: 4, kind: input, shape index: {}]
  %s5 = inlined_call_operand.vmem [shape: f32[16,1], index: 5, kind: input, shape index: {}]
  %s6 = inlined_call_operand.vmem [shape: f32[1,144], index: 6, kind: input, shape index: {}]
  %s7 = inlined_call_operand.<no memory space> [shape: f32[1,1], index: 7, kind: input, shape index: {}]
  %s8 = inlined_call_operand.hbm [shape: f32[2,1,384], index: 8, kind: output, shape index: {}]
  %s9 = sld [smem:[#allocation0]]
  $region73: #{tpu_custom_call.1} parent=0
    _
  %s11 = ssub.s32 1, %s9
  %s12 = scalar_select 0, %s11, %s9
  %v13 = vstv %s7
  %14 = vst [vmem:[#allocation7] sm:$0x1] %v13
  $region1: #{tpu_custom_call.1} parent=0
    #allocation8 [shape = 'u8[40960]{0}', space=vmem, size = 0xa000, scoped, tag = 'input window, operand 0']
    #allocation9 [shape = 's32[2]{0}', space=sflag, size = 0x8, scoped, tag = 'scoped memory for tpu_custom_call.1']
    #allocation10 [shape = 's32[2]{0}', space=sflag, size = 0x8, scoped, tag = 'scoped memory for tpu_custom_call.1']
    #allocation11 [shape = 'u8[8192]{0}', space=vmem, size = 0x2000, scoped, tag = 'input window, operand 2, single buffered']
    #allocation12 [shape = 's32[1]{0}', space=sflag, size = 0x4, scoped, tag = 'scoped memory for tpu_custom_call.1']
    #allocation13 [shape = 'u8[3072]{0}', space=vmem, size = 0xc00, scoped, tag = 'output window, operand 0']
    %15 = vsyncpa [#allocation9], 0
    %s16 = scalar_lea.sflag [#allocation9], 1
    %17 = vsyncpa %s16, 0
    %18 = vsyncpa [#allocation12], 0
    %19 = vsyncpa [#allocation10], 0
    %s20 = scalar_lea.sflag [#allocation10], 1
    %21 = vsyncpa %s20, 0
    loop: start=0, step=1, limit=4
    $region2: #{tpu_custom_call.1} parent=1 // loop_pre_header
      _
    $region3: #{tpu_custom_call.1} parent=1 // loop_header
      %s23 = sphi 0, %s27
      %p24 = scmp.ge.s32.totalorder %s23, 4
      %s33 = sphi 0, %s35
      %s36 = sphi 0, %s33
      %s37 = sphi 0, %s36
      %s53 = sphi 0, %s37
      %s57 = sphi 0, %s57
      %s59 = sphi 0, %s57
      %s60 = sphi 0, %s59
      %s74 = sphi 0, %s60
      %s78 = sphi 0, %s78
      %s80 = sphi 0, %s78
      %s81 = sphi 0, %s80
      %s95 = sphi 0, %s81
      %s99 = sphi 0, %s99
      %s101 = sphi 0, %s99
      %s102 = sphi 0, %s101
      %s116 = sphi 0, %s102
      %s120 = sphi 0, %s120
      %s122 = sphi 0, %s120
      %s123 = sphi 0, %s122
      %s137 = sphi 0, %s123
      %s141 = sphi 0, %s141
      %s143 = sphi 0, %s141
      %s144 = sphi 0, %s143
      %s158 = sphi 0, %s144
      %s162 = sphi 0, %s162
      %s164 = sphi 0, %s162
      %s165 = sphi 0, %s164
      %s179 = sphi 0, %s165
      %s183 = sphi 0, %s183
      %s185 = sphi 0, %s183
      %s186 = sphi 0, %s185
      %s200 = sphi 0, %s186
      %s206 = sphi 0, %s208
      %s209 = sphi 0, %s206
      %s210 = sphi 0, %s209
      %s226 = sphi 0, %s210
    $region4: #{tpu_custom_call.1} parent=1 // loop_header_branch
      %26 = sbr.rel (%p24) target = $region8
    $region5: #{tpu_custom_call.1} parent=1 // loop_body
      %s28 = ssub.s32 %s23, 1
      %s29 = ssub.s32 %s23, 2
      %s30 = sadd.s32 %s23, 1
      %s31 = ssub.s32 %s23, %s30
      %p32 = scmp.eq.s32.totalorder %s31, 0
      %s34 = sadd.s32 %s33, 1
      %s35 = scalar_select %p32, %s33, %s34
      %p38 = pneg %p32
      %p39 = scmp.eq.s32.totalorder %s23, 1
      %p40 = por %p38, %p39
      %p41 = scmp.ne.s32.totalorder %s33, %s36
      %p42 = scmp.eq.s32.totalorder %s23, 0
      %p43 = por %p41, %p42
      %p44 = scmp.ne.s32.totalorder %s33, %s36
      %p45 = scmp.eq.s32.totalorder %s28, 1
      %p46 = por %p44, %p45
      %p47 = scmp.ne.s32.totalorder %s36, %s37
      %p48 = scmp.eq.s32.totalorder %s28, 0
      %p49 = por %p47, %p48
      %p50 = scmp.ne.s32.totalorder %s36, %s37
      %p51 = scmp.eq.s32.totalorder %s29, 1
      %p52 = por %p50, %p51
      %p54 = scmp.ne.s32.totalorder %s37, %s53
      %p55 = scmp.eq.s32.totalorder %s29, 0
      %p56 = por %p54, %p55
      %s58 = sadd.s32 %s57, 1
      %p61 = scmp.eq.s32.totalorder %s23, 1
      %p62 = scmp.ne.s32.totalorder %s57, %s59
      %p63 = scmp.eq.s32.totalorder %s23, 0
      %p64 = por %p62, %p63
      %p65 = scmp.ne.s32.totalorder %s57, %s59
      %p66 = scmp.eq.s32.totalorder %s28, 1
      %p67 = por %p65, %p66
      %p68 = scmp.ne.s32.totalorder %s59, %s60
      %p69 = scmp.eq.s32.totalorder %s28, 0
      %p70 = por %p68, %p69
      %p71 = scmp.ne.s32.totalorder %s59, %s60
      %p72 = scmp.eq.s32.totalorder %s29, 1
      %p73 = por %p71, %p72
      %p75 = scmp.ne.s32.totalorder %s60, %s74
      %p76 = scmp.eq.s32.totalorder %s29, 0
      %p77 = por %p75, %p76
      %s79 = sadd.s32 %s78, 1
      %p82 = scmp.eq.s32.totalorder %s23, 1
      %p83 = scmp.ne.s32.totalorder %s78, %s80
      %p84 = scmp.eq.s32.totalorder %s23, 0
      %p85 = por %p83, %p84
      %p86 = scmp.ne.s32.totalorder %s78, %s80
      %p87 = scmp.eq.s32.totalorder %s28, 1
      %p88 = por %p86, %p87
      %p89 = scmp.ne.s32.totalorder %s80, %s81
      %p90 = scmp.eq.s32.totalorder %s28, 0
      %p91 = por %p89, %p90
      %p92 = scmp.ne.s32.totalorder %s80, %s81
      %p93 = scmp.eq.s32.totalorder %s29, 1
      %p94 = por %p92, %p93
      %p96 = scmp.ne.s32.totalorder %s81, %s95
      %p97 = scmp.eq.s32.totalorder %s29, 0
      %p98 = por %p96, %p97
      %s100 = sadd.s32 %s99, 1
      %p103 = scmp.eq.s32.totalorder %s23, 1
      %p104 = scmp.ne.s32.totalorder %s99, %s101
      %p105 = scmp.eq.s32.totalorder %s23, 0
      %p106 = por %p104, %p105
      %p107 = scmp.ne.s32.totalorder %s99, %s101
      %p108 = scmp.eq.s32.totalorder %s28, 1
      %p109 = por %p107, %p108
      %p110 = scmp.ne.s32.totalorder %s101, %s102
      %p111 = scmp.eq.s32.totalorder %s28, 0
      %p112 = por %p110, %p111
      %p113 = scmp.ne.s32.totalorder %s101, %s102
      %p114 = scmp.eq.s32.totalorder %s29, 1
      %p115 = por %p113, %p114
      %p117 = scmp.ne.s32.totalorder %s102, %s116
      %p118 = scmp.eq.s32.totalorder %s29, 0
      %p119 = por %p117, %p118
      %s121 = sadd.s32 %s120, 1
      %p124 = scmp.eq.s32.totalorder %s23, 1
      %p125 = scmp.ne.s32.totalorder %s120, %s122
      %p126 = scmp.eq.s32.totalorder %s23, 0
      %p127 = por %p125, %p126
      %p128 = scmp.ne.s32.totalorder %s120, %s122
      %p129 = scmp.eq.s32.totalorder %s28, 1
      %p130 = por %p128, %p129
      %p131 = scmp.ne.s32.totalorder %s122, %s123
      %p132 = scmp.eq.s32.totalorder %s28, 0
      %p133 = por %p131, %p132
      %p134 = scmp.ne.s32.totalorder %s122, %s123
      %p135 = scmp.eq.s32.totalorder %s29, 1
      %p136 = por %p134, %p135
      %p138 = scmp.ne.s32.totalorder %s123, %s137
      %p139 = scmp.eq.s32.totalorder %s29, 0
      %p140 = por %p138, %p139
      %s142 = sadd.s32 %s141, 1
      %p145 = scmp.eq.s32.totalorder %s23, 1
      %p146 = scmp.ne.s32.totalorder %s141, %s143
      %p147 = scmp.eq.s32.totalorder %s23, 0
      %p148 = por %p146, %p147
      %p149 = scmp.ne.s32.totalorder %s141, %s143
      %p150 = scmp.eq.s32.totalorder %s28, 1
      %p151 = por %p149, %p150
      %p152 = scmp.ne.s32.totalorder %s143, %s144
      %p153 = scmp.eq.s32.totalorder %s28, 0
      %p154 = por %p152, %p153
      %p155 = scmp.ne.s32.totalorder %s143, %s144
      %p156 = scmp.eq.s32.totalorder %s29, 1
      %p157 = por %p155, %p156
      %p159 = scmp.ne.s32.totalorder %s144, %s158
      %p160 = scmp.eq.s32.totalorder %s29, 0
      %p161 = por %p159, %p160
      %s163 = sadd.s32 %s162, 1
      %p166 = scmp.eq.s32.totalorder %s23, 1
      %p167 = scmp.ne.s32.totalorder %s162, %s164
      %p168 = scmp.eq.s32.totalorder %s23, 0
      %p169 = por %p167, %p168
      %p170 = scmp.ne.s32.totalorder %s162, %s164
      %p171 = scmp.eq.s32.totalorder %s28, 1
      %p172 = por %p170, %p171
      %p173 = scmp.ne.s32.totalorder %s164, %s165
      %p174 = scmp.eq.s32.totalorder %s28, 0
      %p175 = por %p173, %p174
      %p176 = scmp.ne.s32.totalorder %s164, %s165
      %p177 = scmp.eq.s32.totalorder %s29, 1
      %p178 = por %p176, %p177
      %p180 = scmp.ne.s32.totalorder %s165, %s179
      %p181 = scmp.eq.s32.totalorder %s29, 0
      %p182 = por %p180, %p181
      %s184 = sadd.s32 %s183, 1
      %p187 = scmp.eq.s32.totalorder %s23, 1
      %p188 = scmp.ne.s32.totalorder %s183, %s185
      %p189 = scmp.eq.s32.totalorder %s23, 0
      %p190 = por %p188, %p189
      %p191 = scmp.ne.s32.totalorder %s183, %s185
      %p192 = scmp.eq.s32.totalorder %s28, 1
      %p193 = por %p191, %p192
      %p194 = scmp.ne.s32.totalorder %s185, %s186
      %p195 = scmp.eq.s32.totalorder %s28, 0
      %p196 = por %p194, %p195
      %p197 = scmp.ne.s32.totalorder %s185, %s186
      %p198 = scmp.eq.s32.totalorder %s29, 1
      %p199 = por %p197, %p198
      %p201 = scmp.ne.s32.totalorder %s186, %s200
      %p202 = scmp.eq.s32.totalorder %s29, 0
      %p203 = por %p201, %p202
      %s204 = ssub.s32 %s23, %s30
      %p205 = scmp.eq.s32.totalorder %s204, 0
      %s207 = sadd.s32 %s206, 1
      %s208 = scalar_select %p205, %s206, %s207
      %p211 = pneg %p205
      %p212 = scmp.eq.s32.totalorder %s23, 1
      %p213 = por %p211, %p212
      %p214 = scmp.ne.s32.totalorder %s206, %s209
      %p215 = scmp.eq.s32.totalorder %s23, 0
      %p216 = por %p214, %p215
      %p217 = scmp.ne.s32.totalorder %s206, %s209
      %p218 = scmp.eq.s32.totalorder %s28, 1
      %p219 = por %p217, %p218
      %p220 = scmp.ne.s32.totalorder %s209, %s210
      %p221 = scmp.eq.s32.totalorder %s28, 0
      %p222 = por %p220, %p221
      %p223 = scmp.ne.s32.totalorder %s209, %s210
      %p224 = scmp.eq.s32.totalorder %s29, 1
      %p225 = por %p223, %p224
      %p227 = scmp.ne.s32.totalorder %s210, %s226
      %p228 = scmp.eq.s32.totalorder %s29, 0
      %p229 = por %p227, %p228
      %p230 = scmp.le.s32.totalorder 1, %s23
      %p231 = scmp.lt.s32.totalorder %s23, 3
      %p232 = pnand %p230, %p231
      %p233 = pneg %p232
      // Predicated region
      $region9: #{tpu_custom_call.1} parent=5 // pred_check
        _
      $region10: #{tpu_custom_call.1} parent=5 // pred_check_branch
        %235 = sbr.rel (%p232) target = $region12
      $region11: #{tpu_custom_call.1} parent=5 // pred_region
        %s236 = ssub.s32 %s23, 1
        // Predicated region
        $region13: #{tpu_custom_call.1} parent=11 // pred_check
          %p237 = pneg %p70
        $region14: #{tpu_custom_call.1} parent=11 // pred_check_branch
          %239 = sbr.rel (%p237) target = $region16
        $region15: #{tpu_custom_call.1} parent=11 // pred_region
          _
        $region16: #{tpu_custom_call.1} parent=11 // pred_fallthru
          _
        // Predicated region
        $region17: #{tpu_custom_call.1} parent=11 // pred_check
          %p240 = pneg %p91
        $region18: #{tpu_custom_call.1} parent=11 // pred_check_branch
          %242 = sbr.rel (%p240) target = $region20
        $region19: #{tpu_custom_call.1} parent=11 // pred_region
          %244 = vsyncadd [#allocation12], 0
          %s245 = sshll.u32 %s2, 4
          %s246 = int_to_ptr.hbm [resolvable:$true] %s245
          %s247 = sshll.u32 [#allocation11], 4
          %s248 = int_to_ptr.vmem [resolvable:$true] %s247
          %253 = dma.hbm_to_vmem [thread:$0]  %s246, 256, %s248, [#allocation12], 128, 128, 8
        $region20: #{tpu_custom_call.1} parent=11 // pred_fallthru
          _
        // Predicated region
        $region21: #{tpu_custom_call.1} parent=11 // pred_check
          %p254 = pneg %p112
        $region22: #{tpu_custom_call.1} parent=11 // pred_check_branch
          %256 = sbr.rel (%p254) target = $region24
        $region23: #{tpu_custom_call.1} parent=11 // pred_region
          _
        $region24: #{tpu_custom_call.1} parent=11 // pred_fallthru
          _
        // Predicated region
        $region25: #{tpu_custom_call.1} parent=11 // pred_check
          %p257 = pneg %p133
        $region26: #{tpu_custom_call.1} parent=11 // pred_check_branch
          %259 = sbr.rel (%p257) target = $region28
        $region27: #{tpu_custom_call.1} parent=11 // pred_region
          _
        $region28: #{tpu_custom_call.1} parent=11 // pred_fallthru
          _
        // Predicated region
        $region29: #{tpu_custom_call.1} parent=11 // pred_check
          %p260 = pneg %p154
        $region30: #{tpu_custom_call.1} parent=11 // pred_check_branch
          %262 = sbr.rel (%p260) target = $region32
        $region31: #{tpu_custom_call.1} parent=11 // pred_region
          _
        $region32: #{tpu_custom_call.1} parent=11 // pred_fallthru
          _
        // Predicated region
        $region33: #{tpu_custom_call.1} parent=11 // pred_check
          %p263 = pneg %p175
        $region34: #{tpu_custom_call.1} parent=11 // pred_check_branch
          %265 = sbr.rel (%p263) target = $region36
        $region35: #{tpu_custom_call.1} parent=11 // pred_region
          _
        $region36: #{tpu_custom_call.1} parent=11 // pred_fallthru
          _
        // Predicated region
        $region37: #{tpu_custom_call.1} parent=11 // pred_check
          %p266 = pneg %p196
        $region38: #{tpu_custom_call.1} parent=11 // pred_check_branch
          %268 = sbr.rel (%p266) target = $region40
        $region39: #{tpu_custom_call.1} parent=11 // pred_region
          _
        $region40: #{tpu_custom_call.1} parent=11 // pred_fallthru
          _
      $region12: #{tpu_custom_call.1} parent=5 // pred_fallthru
        _
      %p269 = scmp.lt.s32.totalorder %s23, 2
      // Predicated region
      $region41: #{tpu_custom_call.1} parent=5 // pred_check
        %p270 = pneg %p269
      $region42: #{tpu_custom_call.1} parent=5 // pred_check_branch
        %272 = sbr.rel (%p270) target = $region44
      $region43: #{tpu_custom_call.1} parent=5 // pred_region
        // Predicated region
        $region45: #{tpu_custom_call.1} parent=43 // pred_check
          %p273 = pneg %p43
        $region46: #{tpu_custom_call.1} parent=43 // pred_check_branch
          %275 = sbr.rel (%p273) target = $region48
        $region47: #{tpu_custom_call.1} parent=43 // pred_region
          %s276 = sand.u32 %s33, 1
          %s277 = scalar_lea.sflag [#allocation9], %s276
          %s278 = sand.u32 %s33, 1
          %s279 = smul.addr %s278, 40
          %s280 = scalar_lea.vmem [#allocation8], %s279
          %282 = vsyncadd %s277, 0
          %s283 = smul.addr %s23, 5
          %s284 = smul.addr %s283, 8
          %s285 = scalar_lea.hbm %s0, %s284
          %s287 = sshll.u32 %s285, 4
          %s288 = int_to_ptr.hbm [resolvable:$true] %s287
          %s289 = sshll.u32 %s280, 4
          %s290 = int_to_ptr.vmem [resolvable:$true] %s289
          %292 = dma.hbm_to_vmem [thread:$0]  %s288, 640, %s290, %s277
        $region48: #{tpu_custom_call.1} parent=43 // pred_fallthru
          _
      $region44: #{tpu_custom_call.1} parent=5 // pred_fallthru
        _
      %p293 = scmp.le.s32.totalorder 1, %s23
      %p294 = scmp.lt.s32.totalorder %s23, 3
      %p295 = pnand %p293, %p294
      %p296 = pneg %p295
      // Predicated region
      $region49: #{tpu_custom_call.1} parent=5 // pred_check
        _
      $region50: #{tpu_custom_call.1} parent=5 // pred_check_branch
        %298 = sbr.rel (%p295) target = $region52
      $region51: #{tpu_custom_call.1} parent=5 // pred_region
        %s299 = ssub.s32 %s23, 1
        %s300 = sand.u32 %s36, 1
        %s301 = scalar_lea.sflag [#allocation9], %s300
        %s302 = sand.u32 %s36, 1
        %s303 = smul.addr %s302, 40
        %s304 = scalar_lea.vmem [#allocation8], %s303
        // Predicated region
        $region53: #{tpu_custom_call.1} parent=51 // pred_check
          %p305 = pneg %p49
        $region54: #{tpu_custom_call.1} parent=51 // pred_check_branch
          %307 = sbr.rel (%p305) target = $region56
        $region55: #{tpu_custom_call.1} parent=51 // pred_region
          %309 = dma.done %s301, 640
        $region56: #{tpu_custom_call.1} parent=51 // pred_fallthru
          _
        // Predicated region
        $region57: #{tpu_custom_call.1} parent=51 // pred_check
          %p310 = pneg %p91
        $region58: #{tpu_custom_call.1} parent=51 // pred_check_branch
          %312 = sbr.rel (%p310) target = $region60
        $region59: #{tpu_custom_call.1} parent=51 // pred_region
          %314 = dma.done [#allocation12], 256
        $region60: #{tpu_custom_call.1} parent=51 // pred_fallthru
          _
        %s315 = sand.u32 %s36, 1
        %s316 = scalar_lea.sflag [#allocation9], %s315
        %s317 = sand.u32 %s36, 1
        %s318 = smul.addr %s317, 40
        %s319 = scalar_lea.vmem [#allocation8], %s318
        %p320 = pneg %p49
        %p321 = pneg %p46
        %p322 = pneg %p70
        %p323 = pneg %p67
        %p324 = pneg %p91
        %p325 = pneg %p88
        %p326 = pneg %p112
        %p327 = pneg %p109
        %p328 = pneg %p133
        %p329 = pneg %p130
        %p330 = pneg %p154
        %p331 = pneg %p151
        %p332 = pneg %p175
        %p333 = pneg %p172
        %p334 = pneg %p196
        %p335 = pneg %p193
        %p336 = pneg %p222
        %p337 = pneg %p219
        %s338 = sand.u32 %s209, 1
        %s339 = scalar_lea.sflag [#allocation10], %s338
        %s340 = sand.u32 %s209, 1
        %s341 = smul.addr %s340, 3
        %s342 = scalar_lea.vmem [#allocation13], %s341
        %v343 = vld [vmem:[%s1] sm:$0x7]
        %v344 = vld [vmem:[%s304] sm:$0xff]
        %v345 = vld [vmem:[%s304 + $0x8] sm:$0xff]
        %v346 = vld [vmem:[%s304 + $0x10] sm:$0xff]
        %v347 = vld [vmem:[%s304 + $0x18] sm:$0xff]
        %352 = vrot.lane.b32.xlu0 %v344, 19
        %v353 = vpop.permute.xlu0 %352
        %354 = vrot.lane.b32.xlu0 %v345, 19
        %v355 = vpop.permute.xlu0 %354
        %356 = vrot.lane.b32.xlu0 %v346, 19
        %v357 = vpop.permute.xlu0 %356
        %358 = vrot.lane.b32.xlu0 %v347, 19
        %v359 = vpop.permute.xlu0 %358
        %vm360 = vcmask 154624
        %v361 = vsel %vm360, %v353, %v355
        %v362 = vsel %vm360, %v355, %v357
        %v363 = vsel %vm360, %v357, %v359
        %367 = vst [vmem:[#allocation2] sm:$0xff] %v361
        %368 = vst [vmem:[#allocation2 + $0x8] sm:$0xff] %v362
        %369 = vst [vmem:[#allocation2 + $0x10] sm:$0xff] %v363
        %v370 = vld [vmem:[%s304] sm:$0xff]
        %v371 = vld [vmem:[%s304 + $0x8] sm:$0xff]
        %v372 = vld [vmem:[%s304 + $0x10] sm:$0xff]
        %v373 = vld [vmem:[%s304 + $0x18] sm:$0xff]
        %378 = vrot.lane.b32.xlu0 %v370, 18
        %v379 = vpop.permute.xlu0 %378
        %380 = vrot.lane.b32.xlu0 %v371, 18
        %v381 = vpop.permute.xlu0 %380
        %382 = vrot.lane.b32.xlu0 %v372, 18
        %v383 = vpop.permute.xlu0 %382
        %384 = vrot.lane.b32.xlu0 %v373, 18
        %v385 = vpop.permute.xlu0 %384
        %vm386 = vcmask 146432
        %v387 = vsel %vm386, %v379, %v381
        %v388 = vsel %vm386, %v381, %v383
        %v389 = vsel %vm386, %v383, %v385
        %393 = vst [vmem:[#allocation2 + $0x18] sm:$0xff] %v387
        %394 = vst [vmem:[#allocation2 + $0x20] sm:$0xff] %v388
        %395 = vst [vmem:[#allocation2 + $0x28] sm:$0xff] %v389
        %v396 = vld [vmem:[%s304] sm:$0xff]
        %v397 = vld [vmem:[%s304 + $0x8] sm:$0xff]
        %v398 = vld [vmem:[%s304 + $0x10] sm:$0xff]
        %v399 = vld [vmem:[%s304 + $0x18] sm:$0xff]
        %404 = vrot.lane.b32.xlu0 %v396, 17
        %v405 = vpop.permute.xlu0 %404
        %406 = vrot.lane.b32.xlu0 %v397, 17
        %v407 = vpop.permute.xlu0 %406
        %408 = vrot.lane.b32.xlu0 %v398, 17
        %v409 = vpop.permute.xlu0 %408
        %410 = vrot.lane.b32.xlu0 %v399, 17
        %v411 = vpop.permute.xlu0 %410
        %vm412 = vcmask 138240
        %v413 = vsel %vm412, %v405, %v407
        %v414 = vsel %vm412, %v407, %v409
        %v415 = vsel %vm412, %v409, %v411
        %419 = vst [vmem:[#allocation2 + $0x30] sm:$0xff] %v413
        %420 = vst [vmem:[#allocation2 + $0x38] sm:$0xff] %v414
        %421 = vst [vmem:[#allocation2 + $0x40] sm:$0xff] %v415
        %v422 = vld [vmem:[%s304] sm:$0xff]
        %v423 = vld [vmem:[%s304 + $0x8] sm:$0xff]
        %v424 = vld [vmem:[%s304 + $0x10] sm:$0xff]
        %v425 = vld [vmem:[%s304 + $0x18] sm:$0xff]
        %430 = vrot.lane.b32.xlu0 %v422, 1
        %v431 = vpop.permute.xlu0 %430
        %432 = vrot.lane.b32.xlu0 %v423, 1
        %v433 = vpop.permute.xlu0 %432
        %434 = vrot.lane.b32.xlu0 %v424, 1
        %v435 = vpop.permute.xlu0 %434
        %436 = vrot.lane.b32.xlu0 %v425, 1
        %v437 = vpop.permute.xlu0 %436
        %vm438 = vcmask 7168
        %v439 = vsel %vm438, %v431, %v433
        %v440 = vsel %vm438, %v433, %v435
        %v441 = vsel %vm438, %v435, %v437
        %445 = vst [vmem:[#allocation2 + $0x48] sm:$0xff] %v439
        %446 = vst [vmem:[#allocation2 + $0x50] sm:$0xff] %v440
        %447 = vst [vmem:[#allocation2 + $0x58] sm:$0xff] %v441
        %v448 = vld [vmem:[%s304 + $0x8] sm:$0xff]
        %v449 = vld [vmem:[%s304 + $0x10] sm:$0xff]
        %v450 = vld [vmem:[%s304 + $0x18] sm:$0xff]
        %451 = vst [vmem:[#allocation2 + $0x60] sm:$0xff] %v448
        %452 = vst [vmem:[#allocation2 + $0x68] sm:$0xff] %v449
        %453 = vst [vmem:[#allocation2 + $0x70] sm:$0xff] %v450
        %v454 = vld [vmem:[%s304 + $0x8] sm:$0xff]
        %v455 = vld [vmem:[%s304 + $0x10] sm:$0xff]
        %v456 = vld [vmem:[%s304 + $0x18] sm:$0xff]
        %v457 = vld [vmem:[%s304 + $0x20] sm:$0xff]
        %462 = vrot.lane.b32.xlu0 %v454, 127
        %v463 = vpop.permute.xlu0 %462
        %464 = vrot.lane.b32.xlu0 %v455, 127
        %v465 = vpop.permute.xlu0 %464
        %466 = vrot.lane.b32.xlu0 %v456, 127
        %v467 = vpop.permute.xlu0 %466
        %468 = vrot.lane.b32.xlu0 %v457, 127
        %v469 = vpop.permute.xlu0 %468
        %vm470 = vcmask 1039360
        %v471 = vsel %vm470, %v463, %v465
        %v472 = vsel %vm470, %v465, %v467
        %v473 = vsel %vm470, %v467, %v469
        %477 = vst [vmem:[#allocation2 + $0x78] sm:$0xff] %v471
        %478 = vst [vmem:[#allocation2 + $0x80] sm:$0xff] %v472
        %479 = vst [vmem:[#allocation2 + $0x88] sm:$0xff] %v473
        %v480 = vld [vmem:[%s304 + $0x8] sm:$0xff]
        %v481 = vld [vmem:[%s304 + $0x10] sm:$0xff]
        %v482 = vld [vmem:[%s304 + $0x18] sm:$0xff]
        %v483 = vld [vmem:[%s304 + $0x20] sm:$0xff]
        %488 = vrot.lane.b32.xlu0 %v480, 111
        %v489 = vpop.permute.xlu0 %488
        %490 = vrot.lane.b32.xlu0 %v481, 111
        %v491 = vpop.permute.xlu0 %490
        %492 = vrot.lane.b32.xlu0 %v482, 111
        %v493 = vpop.permute.xlu0 %492
        %494 = vrot.lane.b32.xlu0 %v483, 111
        %v495 = vpop.permute.xlu0 %494
        %vm496 = vcmask 908288
        %v497 = vsel %vm496, %v489, %v491
        %v498 = vsel %vm496, %v491, %v493
        %v499 = vsel %vm496, %v493, %v495
        %503 = vst [vmem:[#allocation2 + $0x90] sm:$0xff] %v497
        %504 = vst [vmem:[#allocation2 + $0x98] sm:$0xff] %v498
        %505 = vst [vmem:[#allocation2 + $0xa0] sm:$0xff] %v499
        %v506 = vld [vmem:[%s304 + $0x8] sm:$0xff]
        %v507 = vld [vmem:[%s304 + $0x10] sm:$0xff]
        %v508 = vld [vmem:[%s304 + $0x18] sm:$0xff]
        %v509 = vld [vmem:[%s304 + $0x20] sm:$0xff]
        %514 = vrot.lane.b32.xlu0 %v506, 110
        %v515 = vpop.permute.xlu0 %514
        %516 = vrot.lane.b32.xlu0 %v507, 110
        %v517 = vpop.permute.xlu0 %516
        %518 = vrot.lane.b32.xlu0 %v508, 110
        %v519 = vpop.permute.xlu0 %518
        %520 = vrot.lane.b32.xlu0 %v509, 110
        %v521 = vpop.permute.xlu0 %520
        %vm522 = vcmask 900096
        %v523 = vsel %vm522, %v515, %v517
        %v524 = vsel %vm522, %v517, %v519
        %v525 = vsel %vm522, %v519, %v521
        %529 = vst [vmem:[#allocation2 + $0xa8] sm:$0xff] %v523
        %530 = vst [vmem:[#allocation2 + $0xb0] sm:$0xff] %v524
        %531 = vst [vmem:[#allocation2 + $0xb8] sm:$0xff] %v525
        %v532 = vld [vmem:[%s304 + $0x8] sm:$0xff]
        %v533 = vld [vmem:[%s304 + $0x10] sm:$0xff]
        %v534 = vld [vmem:[%s304 + $0x18] sm:$0xff]
        %v535 = vld [vmem:[%s304 + $0x20] sm:$0xff]
        %540 = vrot.lane.b32.xlu0 %v532, 109
        %v541 = vpop.permute.xlu0 %540
        %542 = vrot.lane.b32.xlu0 %v533, 109
        %v543 = vpop.permute.xlu0 %542
        %544 = vrot.lane.b32.xlu0 %v534, 109
        %v545 = vpop.permute.xlu0 %544
        %546 = vrot.lane.b32.xlu0 %v535, 109
        %v547 = vpop.permute.xlu0 %546
        %vm548 = vcmask 891904
        %v549 = vsel %vm548, %v541, %v543
        %v550 = vsel %vm548, %v543, %v545
        %v551 = vsel %vm548, %v545, %v547
        %555 = vst [vmem:[#allocation2 + $0xc0] sm:$0xff] %v549
        %556 = vst [vmem:[#allocation2 + $0xc8] sm:$0xff] %v550
        %557 = vst [vmem:[#allocation2 + $0xd0] sm:$0xff] %v551
        %v558 = vld [vmem:[#allocation11] sm:$0xff]
        %v559 = vld [vmem:[#allocation11 + $0x8] sm:$0xff]
        %v560 = vld [vmem:[#allocation2] sm:$0xff]
        %v561 = vld [vmem:[#allocation2 + $0x8] sm:$0xff]
        %v562 = vld [vmem:[#allocation2 + $0x10] sm:$0xff]
        %v563 = vld [vmem:[#allocation2 + $0x18] sm:$0xff]
        %v564 = vld [vmem:[#allocation2 + $0x20] sm:$0xff]
        %v565 = vld [vmem:[#allocation2 + $0x28] sm:$0xff]
        %v566 = vld [vmem:[#allocation2 + $0x30] sm:$0xff]
        %v567 = vld [vmem:[#allocation2 + $0x38] sm:$0xff]
        %v568 = vld [vmem:[#allocation2 + $0x40] sm:$0xff]
        %v569 = vld [vmem:[#allocation2 + $0x48] sm:$0xff]
        %v570 = vld [vmem:[#allocation2 + $0x50] sm:$0xff]
        %v571 = vld [vmem:[#allocation2 + $0x58] sm:$0xff]
        %v572 = vld [vmem:[#allocation2 + $0x60] sm:$0xff]
        %v573 = vld [vmem:[#allocation2 + $0x68] sm:$0xff]
        %v574 = vld [vmem:[#allocation2 + $0x70] sm:$0xff]
        %v575 = vld [vmem:[#allocation2 + $0x78] sm:$0xff]
        %v576 = vld [vmem:[#allocation2 + $0x80] sm:$0xff]
        %v577 = vld [vmem:[#allocation2 + $0x88] sm:$0xff]
        %v578 = vld [vmem:[#allocation2 + $0x90] sm:$0xff]
        %v579 = vld [vmem:[#allocation2 + $0x98] sm:$0xff]
        %v580 = vld [vmem:[#allocation2 + $0xa0] sm:$0xff]
        %v581 = vld [vmem:[#allocation2 + $0xa8] sm:$0xff]
        %v582 = vld [vmem:[#allocation2 + $0xb0] sm:$0xff]
        %v583 = vld [vmem:[#allocation2 + $0xb8] sm:$0xff]
        %v584 = vld [vmem:[#allocation2 + $0xc0] sm:$0xff]
        %v585 = vld [vmem:[#allocation2 + $0xc8] sm:$0xff]
        %v586 = vld [vmem:[#allocation2 + $0xd0] sm:$0xff]
        %v587 = vld [vmem:[%s3] sm:$0xff]
        %v588 = vld [vmem:[%s3 + $0x8] sm:$0xff]
        %590 = vset.pattern.permute.xlu0 0
        %591 = vperm.xlu0 %590, %v587
        %v592 = vpop.permute.xlu0 %591
        %595 = vset.pattern.permute.xlu0 0
        %596 = vperm.xlu0 %595, %v588
        %v597 = vpop.permute.xlu0 %596
        %vm599 = vcmask 588800
        %v601 = vsel %vm599, %v558, 0
        %v604 = vsel %vm599, %v559, 0
        %606 = vmatpush.msra.mxu0 0.0
        %607 = vmatpush.msra.mxu0 0.0
        %608 = vmatpush.msra.mxu0 0.0
        %609 = vmatpush.msra.mxu0 0.0
        %610 = vmatpush.msra.mxu0 0.0
        %611 = vmatpush.msra.mxu0 0.0
        %612 = vmatpush.msra.mxu0 0.0
        %613 = vmatpush.msra.mxu0 %v584
        %614 = vmatpush.msra.mxu0 %v581
        %615 = vmatpush.msra.mxu0 %v578
        %616 = vmatpush.msra.mxu0 %v575
        %617 = vmatpush.msra.mxu0 %v572
        %618 = vmatpush.msra.mxu0 %v569
        %619 = vmatpush.msra.mxu0 %v566
        %620 = vmatpush.msra.mxu0 %v563
        %621 = vmatpush.msra.mxu0 %v560
        %622 = vmatmul.f32.gmra.mxu0 %v601
        %v623 = vpop.f32.mrf.mxu0
        %v624 = vadd.f32 %v592, %v623
        %625 = vmatmul.f32.gmra.mxu0 %v604
        %v626 = vpop.f32.mrf.mxu0
        %v627 = vadd.f32 %v597, %v626
        %628 = vdwg.mxu0
        %629 = vmatpush.msra.mxu0 0.0
        %630 = vmatpush.msra.mxu0 0.0
        %631 = vmatpush.msra.mxu0 0.0
        %632 = vmatpush.msra.mxu0 0.0
        %633 = vmatpush.msra.mxu0 0.0
        %634 = vmatpush.msra.mxu0 0.0
        %635 = vmatpush.msra.mxu0 0.0
        %636 = vmatpush.msra.mxu0 %v585
        %637 = vmatpush.msra.mxu0 %v582
        %638 = vmatpush.msra.mxu0 %v579
        %639 = vmatpush.msra.mxu0 %v576
        %640 = vmatpush.msra.mxu0 %v573
        %641 = vmatpush.msra.mxu0 %v570
        %642 = vmatpush.msra.mxu0 %v567
        %643 = vmatpush.msra.mxu0 %v564
        %644 = vmatpush.msra.mxu0 %v561
        %645 = vmatmul.f32.gmra.mxu0 %v601
        %v646 = vpop.f32.mrf.mxu0
        %v647 = vadd.f32 %v592, %v646
        %648 = vmatmul.f32.gmra.mxu0 %v604
        %v649 = vpop.f32.mrf.mxu0
        %v650 = vadd.f32 %v597, %v649
        %651 = vdwg.mxu0
        %652 = vmatpush.msra.mxu0 0.0
        %653 = vmatpush.msra.mxu0 0.0
        %654 = vmatpush.msra.mxu0 0.0
        %655 = vmatpush.msra.mxu0 0.0
        %656 = vmatpush.msra.mxu0 0.0
        %657 = vmatpush.msra.mxu0 0.0
        %658 = vmatpush.msra.mxu0 0.0
        %659 = vmatpush.msra.mxu0 %v586
        %660 = vmatpush.msra.mxu0 %v583
        %661 = vmatpush.msra.mxu0 %v580
        %662 = vmatpush.msra.mxu0 %v577
        %663 = vmatpush.msra.mxu0 %v574
        %664 = vmatpush.msra.mxu0 %v571
        %665 = vmatpush.msra.mxu0 %v568
        %666 = vmatpush.msra.mxu0 %v565
        %667 = vmatpush.msra.mxu0 %v562
        %668 = vmatmul.f32.gmra.mxu0 %v601
        %v669 = vpop.f32.mrf.mxu0
        %v670 = vadd.f32 %v592, %v669
        %671 = vmatmul.f32.gmra.mxu0 %v604
        %v672 = vpop.f32.mrf.mxu0
        %v673 = vadd.f32 %v597, %v672
        %674 = vdwg.mxu0
        %v675 = vmax.f32 %v624, 0.0
        %v676 = vmax.f32 %v647, 0.0
        %v677 = vmax.f32 %v670, 0.0
        %v678 = vmax.f32 %v627, 0.0
        %v679 = vmax.f32 %v650, 0.0
        %v680 = vmax.f32 %v673, 0.0
        %v682 = vperm.slane %v343, 0
        %v683 = vperm.slane %v343, 1
        %v684 = vperm.slane %v343, 2
        %v688 = vmul.f32 %v675, %v682
        %v689 = vmul.f32 %v676, %v683
        %v690 = vmul.f32 %v677, %v684
        %v691 = vmul.f32 %v678, %v682
        %v692 = vmul.f32 %v679, %v683
        %v693 = vmul.f32 %v680, %v684
        %694 = vst [vmem:[#allocation5 + $0x8] sm:$0xff] %v688
        %695 = vst [vmem:[#allocation5 + $0x10] sm:$0xff] %v689
        %696 = vst [vmem:[#allocation5 + $0x18] sm:$0xff] %v690
        %697 = vst [vmem:[#allocation5 + $0x30] sm:$0xff] %v691
        %698 = vst [vmem:[#allocation5 + $0x38] sm:$0xff] %v692
        %699 = vst [vmem:[#allocation5 + $0x40] sm:$0xff] %v693
        %700 = vst [vmem:[#allocation5] sm:$0xff] 0.0
        %701 = vst [vmem:[#allocation5 + $0x28] sm:$0xff] 0.0
        %702 = vst [vmem:[#allocation5 + $0x20] sm:$0xff] 0.0
        %703 = vst [vmem:[#allocation5 + $0x48] sm:$0xff] 0.0
        %v704 = vld [vmem:[#allocation5] sm:$0xff]
        %v705 = vld [vmem:[#allocation5 + $0x8] sm:$0xff]
        %v706 = vld [vmem:[#allocation5 + $0x10] sm:$0xff]
        %v707 = vld [vmem:[#allocation5 + $0x18] sm:$0xff]
        %v708 = vld [vmem:[#allocation5 + $0x28] sm:$0xff]
        %v709 = vld [vmem:[#allocation5 + $0x30] sm:$0xff]
        %v710 = vld [vmem:[#allocation5 + $0x38] sm:$0xff]
        %v711 = vld [vmem:[#allocation5 + $0x40] sm:$0xff]
        %720 = vrot.lane.b32.xlu0 %v704, 19
        %v721 = vpop.permute.xlu0 %720
        %722 = vrot.lane.b32.xlu0 %v705, 19
        %v723 = vpop.permute.xlu0 %722
        %724 = vrot.lane.b32.xlu0 %v706, 19
        %v725 = vpop.permute.xlu0 %724
        %726 = vrot.lane.b32.xlu0 %v707, 19
        %v727 = vpop.permute.xlu0 %726
        %728 = vrot.lane.b32.xlu0 %v708, 19
        %v729 = vpop.permute.xlu0 %728
        %730 = vrot.lane.b32.xlu0 %v709, 19
        %v731 = vpop.permute.xlu0 %730
        %732 = vrot.lane.b32.xlu0 %v710, 19
        %v733 = vpop.permute.xlu0 %732
        %734 = vrot.lane.b32.xlu0 %v711, 19
        %v735 = vpop.permute.xlu0 %734
        %v736 = vsel %vm360, %v721, %v723
        %v737 = vsel %vm360, %v723, %v725
        %v738 = vsel %vm360, %v725, %v727
        %v739 = vsel %vm360, %v729, %v731
        %v740 = vsel %vm360, %v731, %v733
        %v741 = vsel %vm360, %v733, %v735
        %748 = vst [vmem:[#allocation3] sm:$0xff] %v736
        %749 = vst [vmem:[#allocation3 + $0x8] sm:$0xff] %v737
        %750 = vst [vmem:[#allocation3 + $0x10] sm:$0xff] %v738
        %751 = vst [vmem:[#allocation3 + $0x18] sm:$0xff] %v739
        %752 = vst [vmem:[#allocation3 + $0x20] sm:$0xff] %v740
        %753 = vst [vmem:[#allocation3 + $0x28] sm:$0xff] %v741
        %v754 = vld [vmem:[#allocation5] sm:$0xff]
        %v755 = vld [vmem:[#allocation5 + $0x8] sm:$0xff]
        %v756 = vld [vmem:[#allocation5 + $0x10] sm:$0xff]
        %v757 = vld [vmem:[#allocation5 + $0x18] sm:$0xff]
        %v758 = vld [vmem:[#allocation5 + $0x28] sm:$0xff]
        %v759 = vld [vmem:[#allocation5 + $0x30] sm:$0xff]
        %v760 = vld [vmem:[#allocation5 + $0x38] sm:$0xff]
        %v761 = vld [vmem:[#allocation5 + $0x40] sm:$0xff]
        %770 = vrot.lane.b32.xlu0 %v754, 18
        %v771 = vpop.permute.xlu0 %770
        %772 = vrot.lane.b32.xlu0 %v755, 18
        %v773 = vpop.permute.xlu0 %772
        %774 = vrot.lane.b32.xlu0 %v756, 18
        %v775 = vpop.permute.xlu0 %774
        %776 = vrot.lane.b32.xlu0 %v757, 18
        %v777 = vpop.permute.xlu0 %776
        %778 = vrot.lane.b32.xlu0 %v758, 18
        %v779 = vpop.permute.xlu0 %778
        %780 = vrot.lane.b32.xlu0 %v759, 18
        %v781 = vpop.permute.xlu0 %780
        %782 = vrot.lane.b32.xlu0 %v760, 18
        %v783 = vpop.permute.xlu0 %782
        %784 = vrot.lane.b32.xlu0 %v761, 18
        %v785 = vpop.permute.xlu0 %784
        %v786 = vsel %vm386, %v771, %v773
        %v787 = vsel %vm386, %v773, %v775
        %v788 = vsel %vm386, %v775, %v777
        %v789 = vsel %vm386, %v779, %v781
        %v790 = vsel %vm386, %v781, %v783
        %v791 = vsel %vm386, %v783, %v785
        %798 = vst [vmem:[#allocation3 + $0x30] sm:$0xff] %v786
        %799 = vst [vmem:[#allocation3 + $0x38] sm:$0xff] %v787
        %800 = vst [vmem:[#allocation3 + $0x40] sm:$0xff] %v788
        %801 = vst [vmem:[#allocation3 + $0x48] sm:$0xff] %v789
        %802 = vst [vmem:[#allocation3 + $0x50] sm:$0xff] %v790
        %803 = vst [vmem:[#allocation3 + $0x58] sm:$0xff] %v791
        %v804 = vld [vmem:[#allocation5] sm:$0xff]
        %v805 = vld [vmem:[#allocation5 + $0x8] sm:$0xff]
        %v806 = vld [vmem:[#allocation5 + $0x10] sm:$0xff]
        %v807 = vld [vmem:[#allocation5 + $0x18] sm:$0xff]
        %v808 = vld [vmem:[#allocation5 + $0x28] sm:$0xff]
        %v809 = vld [vmem:[#allocation5 + $0x30] sm:$0xff]
        %v810 = vld [vmem:[#allocation5 + $0x38] sm:$0xff]
        %v811 = vld [vmem:[#allocation5 + $0x40] sm:$0xff]
        %820 = vrot.lane.b32.xlu0 %v804, 17
        %v821 = vpop.permute.xlu0 %820
        %822 = vrot.lane.b32.xlu0 %v805, 17
        %v823 = vpop.permute.xlu0 %822
        %824 = vrot.lane.b32.xlu0 %v806, 17
        %v825 = vpop.permute.xlu0 %824
        %826 = vrot.lane.b32.xlu0 %v807, 17
        %v827 = vpop.permute.xlu0 %826
        %828 = vrot.lane.b32.xlu0 %v808, 17
        %v829 = vpop.permute.xlu0 %828
        %830 = vrot.lane.b32.xlu0 %v809, 17
        %v831 = vpop.permute.xlu0 %830
        %832 = vrot.lane.b32.xlu0 %v810, 17
        %v833 = vpop.permute.xlu0 %832
        %834 = vrot.lane.b32.xlu0 %v811, 17
        %v835 = vpop.permute.xlu0 %834
        %v836 = vsel %vm412, %v821, %v823
        %v837 = vsel %vm412, %v823, %v825
        %v838 = vsel %vm412, %v825, %v827
        %v839 = vsel %vm412, %v829, %v831
        %v840 = vsel %vm412, %v831, %v833
        %v841 = vsel %vm412, %v833, %v835
        %848 = vst [vmem:[#allocation3 + $0x60] sm:$0xff] %v836
        %849 = vst [vmem:[#allocation3 + $0x68] sm:$0xff] %v837
        %850 = vst [vmem:[#allocation3 + $0x70] sm:$0xff] %v838
        %851 = vst [vmem:[#allocation3 + $0x78] sm:$0xff] %v839
        %852 = vst [vmem:[#allocation3 + $0x80] sm:$0xff] %v840
        %853 = vst [vmem:[#allocation3 + $0x88] sm:$0xff] %v841
        %v854 = vld [vmem:[#allocation5] sm:$0xff]
        %v855 = vld [vmem:[#allocation5 + $0x8] sm:$0xff]
        %v856 = vld [vmem:[#allocation5 + $0x10] sm:$0xff]
        %v857 = vld [vmem:[#allocation5 + $0x18] sm:$0xff]
        %v858 = vld [vmem:[#allocation5 + $0x28] sm:$0xff]
        %v859 = vld [vmem:[#allocation5 + $0x30] sm:$0xff]
        %v860 = vld [vmem:[#allocation5 + $0x38] sm:$0xff]
        %v861 = vld [vmem:[#allocation5 + $0x40] sm:$0xff]
        %870 = vrot.lane.b32.xlu0 %v854, 1
        %v871 = vpop.permute.xlu0 %870
        %872 = vrot.lane.b32.xlu0 %v855, 1
        %v873 = vpop.permute.xlu0 %872
        %874 = vrot.lane.b32.xlu0 %v856, 1
        %v875 = vpop.permute.xlu0 %874
        %876 = vrot.lane.b32.xlu0 %v857, 1
        %v877 = vpop.permute.xlu0 %876
        %878 = vrot.lane.b32.xlu0 %v858, 1
        %v879 = vpop.permute.xlu0 %878
        %880 = vrot.lane.b32.xlu0 %v859, 1
        %v881 = vpop.permute.xlu0 %880
        %882 = vrot.lane.b32.xlu0 %v860, 1
        %v883 = vpop.permute.xlu0 %882
        %884 = vrot.lane.b32.xlu0 %v861, 1
        %v885 = vpop.permute.xlu0 %884
        %v886 = vsel %vm438, %v871, %v873
        %v887 = vsel %vm438, %v873, %v875
        %v888 = vsel %vm438, %v875, %v877
        %v889 = vsel %vm438, %v879, %v881
        %v890 = vsel %vm438, %v881, %v883
        %v891 = vsel %vm438, %v883, %v885
        %898 = vst [vmem:[#allocation3 + $0x90] sm:$0xff] %v886
        %899 = vst [vmem:[#allocation3 + $0x98] sm:$0xff] %v887
        %900 = vst [vmem:[#allocation3 + $0xa0] sm:$0xff] %v888
        %901 = vst [vmem:[#allocation3 + $0xa8] sm:$0xff] %v889
        %902 = vst [vmem:[#allocation3 + $0xb0] sm:$0xff] %v890
        %903 = vst [vmem:[#allocation3 + $0xb8] sm:$0xff] %v891
        %v904 = vld [vmem:[#allocation5 + $0x8] sm:$0xff]
        %v905 = vld [vmem:[#allocation5 + $0x10] sm:$0xff]
        %v906 = vld [vmem:[#allocation5 + $0x18] sm:$0xff]
        %v907 = vld [vmem:[#allocation5 + $0x30] sm:$0xff]
        %v908 = vld [vmem:[#allocation5 + $0x38] sm:$0xff]
        %v909 = vld [vmem:[#allocation5 + $0x40] sm:$0xff]
        %910 = vst [vmem:[#allocation3 + $0xc0] sm:$0xff] %v904
        %911 = vst [vmem:[#allocation3 + $0xc8] sm:$0xff] %v905
        %912 = vst [vmem:[#allocation3 + $0xd0] sm:$0xff] %v906
        %913 = vst [vmem:[#allocation3 + $0xd8] sm:$0xff] %v907
        %914 = vst [vmem:[#allocation3 + $0xe0] sm:$0xff] %v908
        %915 = vst [vmem:[#allocation3 + $0xe8] sm:$0xff] %v909
        %v916 = vld [vmem:[#allocation5 + $0x8] sm:$0xff]
        %v917 = vld [vmem:[#allocation5 + $0x10] sm:$0xff]
        %v918 = vld [vmem:[#allocation5 + $0x18] sm:$0xff]
        %v919 = vld [vmem:[#allocation5 + $0x20] sm:$0xff]
        %v920 = vld [vmem:[#allocation5 + $0x30] sm:$0xff]
        %v921 = vld [vmem:[#allocation5 + $0x38] sm:$0xff]
        %v922 = vld [vmem:[#allocation5 + $0x40] sm:$0xff]
        %v923 = vld [vmem:[#allocation5 + $0x48] sm:$0xff]
        %932 = vrot.lane.b32.xlu0 %v916, 127
        %v933 = vpop.permute.xlu0 %932
        %934 = vrot.lane.b32.xlu0 %v917, 127
        %v935 = vpop.permute.xlu0 %934
        %936 = vrot.lane.b32.xlu0 %v918, 127
        %v937 = vpop.permute.xlu0 %936
        %938 = vrot.lane.b32.xlu0 %v919, 127
        %v939 = vpop.permute.xlu0 %938
        %940 = vrot.lane.b32.xlu0 %v920, 127
        %v941 = vpop.permute.xlu0 %940
        %942 = vrot.lane.b32.xlu0 %v921, 127
        %v943 = vpop.permute.xlu0 %942
        %944 = vrot.lane.b32.xlu0 %v922, 127
        %v945 = vpop.permute.xlu0 %944
        %946 = vrot.lane.b32.xlu0 %v923, 127
        %v947 = vpop.permute.xlu0 %946
        %v948 = vsel %vm470, %v933, %v935
        %v949 = vsel %vm470, %v935, %v937
        %v950 = vsel %vm470, %v937, %v939
        %v951 = vsel %vm470, %v941, %v943
        %v952 = vsel %vm470, %v943, %v945
        %v953 = vsel %vm470, %v945, %v947
        %960 = vst [vmem:[#allocation3 + $0xf0] sm:$0xff] %v948
        %961 = vst [vmem:[#allocation3 + $0xf8] sm:$0xff] %v949
        %962 = vst [vmem:[#allocation3 + $0x100] sm:$0xff] %v950
        %963 = vst [vmem:[#allocation3 + $0x108] sm:$0xff] %v951
        %964 = vst [vmem:[#allocation3 + $0x110] sm:$0xff] %v952
        %965 = vst [vmem:[#allocation3 + $0x118] sm:$0xff] %v953
        %v966 = vld [vmem:[#allocation5 + $0x8] sm:$0xff]
        %v967 = vld [vmem:[#allocation5 + $0x10] sm:$0xff]
        %v968 = vld [vmem:[#allocation5 + $0x18] sm:$0xff]
        %v969 = vld [vmem:[#allocation5 + $0x20] sm:$0xff]
        %v970 = vld [vmem:[#allocation5 + $0x30] sm:$0xff]
        %v971 = vld [vmem:[#allocation5 + $0x38] sm:$0xff]
        %v972 = vld [vmem:[#allocation5 + $0x40] sm:$0xff]
        %v973 = vld [vmem:[#allocation5 + $0x48] sm:$0xff]
        %982 = vrot.lane.b32.xlu0 %v966, 111
        %v983 = vpop.permute.xlu0 %982
        %984 = vrot.lane.b32.xlu0 %v967, 111
        %v985 = vpop.permute.xlu0 %984
        %986 = vrot.lane.b32.xlu0 %v968, 111
        %v987 = vpop.permute.xlu0 %986
        %988 = vrot.lane.b32.xlu0 %v969, 111
        %v989 = vpop.permute.xlu0 %988
        %990 = vrot.lane.b32.xlu0 %v970, 111
        %v991 = vpop.permute.xlu0 %990
        %992 = vrot.lane.b32.xlu0 %v971, 111
        %v993 = vpop.permute.xlu0 %992
        %994 = vrot.lane.b32.xlu0 %v972, 111
        %v995 = vpop.permute.xlu0 %994
        %996 = vrot.lane.b32.xlu0 %v973, 111
        %v997 = vpop.permute.xlu0 %996
        %v998 = vsel %vm496, %v983, %v985
        %v999 = vsel %vm496, %v985, %v987
        %v1000 = vsel %vm496, %v987, %v989
        %v1001 = vsel %vm496, %v991, %v993
        %v1002 = vsel %vm496, %v993, %v995
        %v1003 = vsel %vm496, %v995, %v997
        %1010 = vst [vmem:[#allocation3 + $0x120] sm:$0xff] %v998
        %1011 = vst [vmem:[#allocation3 + $0x128] sm:$0xff] %v999
        %1012 = vst [vmem:[#allocation3 + $0x130] sm:$0xff] %v1000
        %1013 = vst [vmem:[#allocation3 + $0x138] sm:$0xff] %v1001
        %1014 = vst [vmem:[#allocation3 + $0x140] sm:$0xff] %v1002
        %1015 = vst [vmem:[#allocation3 + $0x148] sm:$0xff] %v1003
        %v1016 = vld [vmem:[#allocation5 + $0x8] sm:$0xff]
        %v1017 = vld [vmem:[#allocation5 + $0x10] sm:$0xff]
        %v1018 = vld [vmem:[#allocation5 + $0x18] sm:$0xff]
        %v1019 = vld [vmem:[#allocation5 + $0x20] sm:$0xff]
        %v1020 = vld [vmem:[#allocation5 + $0x30] sm:$0xff]
        %v1021 = vld [vmem:[#allocation5 + $0x38] sm:$0xff]
        %v1022 = vld [vmem:[#allocation5 + $0x40] sm:$0xff]
        %v1023 = vld [vmem:[#allocation5 + $0x48] sm:$0xff]
        %1032 = vrot.lane.b32.xlu0 %v1016, 110
        %v1033 = vpop.permute.xlu0 %1032
        %1034 = vrot.lane.b32.xlu0 %v1017, 110
        %v1035 = vpop.permute.xlu0 %1034
        %1036 = vrot.lane.b32.xlu0 %v1018, 110
        %v1037 = vpop.permute.xlu0 %1036
        %1038 = vrot.lane.b32.xlu0 %v1019, 110
        %v1039 = vpop.permute.xlu0 %1038
        %1040 = vrot.lane.b32.xlu0 %v1020, 110
        %v1041 = vpop.permute.xlu0 %1040
        %1042 = vrot.lane.b32.xlu0 %v1021, 110
        %v1043 = vpop.permute.xlu0 %1042
        %1044 = vrot.lane.b32.xlu0 %v1022, 110
        %v1045 = vpop.permute.xlu0 %1044
        %1046 = vrot.lane.b32.xlu0 %v1023, 110
        %v1047 = vpop.permute.xlu0 %1046
        %v1048 = vsel %vm522, %v1033, %v1035
        %v1049 = vsel %vm522, %v1035, %v1037
        %v1050 = vsel %vm522, %v1037, %v1039
        %v1051 = vsel %vm522, %v1041, %v1043
        %v1052 = vsel %vm522, %v1043, %v1045
        %v1053 = vsel %vm522, %v1045, %v1047
        %1060 = vst [vmem:[#allocation3 + $0x150] sm:$0xff] %v1048
        %1061 = vst [vmem:[#allocation3 + $0x158] sm:$0xff] %v1049
        %1062 = vst [vmem:[#allocation3 + $0x160] sm:$0xff] %v1050
        %1063 = vst [vmem:[#allocation3 + $0x168] sm:$0xff] %v1051
        %1064 = vst [vmem:[#allocation3 + $0x170] sm:$0xff] %v1052
        %1065 = vst [vmem:[#allocation3 + $0x178] sm:$0xff] %v1053
        %v1066 = vld [vmem:[#allocation5 + $0x8] sm:$0xff]
        %v1067 = vld [vmem:[#allocation5 + $0x10] sm:$0xff]
        %v1068 = vld [vmem:[#allocation5 + $0x18] sm:$0xff]
        %v1069 = vld [vmem:[#allocation5 + $0x20] sm:$0xff]
        %v1070 = vld [vmem:[#allocation5 + $0x30] sm:$0xff]
        %v1071 = vld [vmem:[#allocation5 + $0x38] sm:$0xff]
        %v1072 = vld [vmem:[#allocation5 + $0x40] sm:$0xff]
        %v1073 = vld [vmem:[#allocation5 + $0x48] sm:$0xff]
        %1082 = vrot.lane.b32.xlu0 %v1066, 109
        %v1083 = vpop.permute.xlu0 %1082
        %1084 = vrot.lane.b32.xlu0 %v1067, 109
        %v1085 = vpop.permute.xlu0 %1084
        %1086 = vrot.lane.b32.xlu0 %v1068, 109
        %v1087 = vpop.permute.xlu0 %1086
        %1088 = vrot.lane.b32.xlu0 %v1069, 109
        %v1089 = vpop.permute.xlu0 %1088
        %1090 = vrot.lane.b32.xlu0 %v1070, 109
        %v1091 = vpop.permute.xlu0 %1090
        %1092 = vrot.lane.b32.xlu0 %v1071, 109
        %v1093 = vpop.permute.xlu0 %1092
        %1094 = vrot.lane.b32.xlu0 %v1072, 109
        %v1095 = vpop.permute.xlu0 %1094
        %1096 = vrot.lane.b32.xlu0 %v1073, 109
        %v1097 = vpop.permute.xlu0 %1096
        %v1098 = vsel %vm548, %v1083, %v1085
        %v1099 = vsel %vm548, %v1085, %v1087
        %v1100 = vsel %vm548, %v1087, %v1089
        %v1101 = vsel %vm548, %v1091, %v1093
        %v1102 = vsel %vm548, %v1093, %v1095
        %v1103 = vsel %vm548, %v1095, %v1097
        %1110 = vst [vmem:[#allocation3 + $0x180] sm:$0xff] %v1098
        %1111 = vst [vmem:[#allocation3 + $0x188] sm:$0xff] %v1099
        %1112 = vst [vmem:[#allocation3 + $0x190] sm:$0xff] %v1100
        %1113 = vst [vmem:[#allocation3 + $0x198] sm:$0xff] %v1101
        %1114 = vst [vmem:[#allocation3 + $0x1a0] sm:$0xff] %v1102
        %1115 = vst [vmem:[#allocation3 + $0x1a8] sm:$0xff] %v1103
        %v1116 = vld [vmem:[%s4] sm:$0xff]
        %v1117 = vld [vmem:[%s4 + $0x8] sm:$0xff]
        %v1118 = vld [vmem:[%s4 + $0x10] sm:$0xff]
        %v1119 = vld [vmem:[%s4 + $0x18] sm:$0xff]
        %v1120 = vld [vmem:[#allocation3] sm:$0xff]
        %v1121 = vld [vmem:[#allocation3 + $0x8] sm:$0xff]
        %v1122 = vld [vmem:[#allocation3 + $0x10] sm:$0xff]
        %v1123 = vld [vmem:[#allocation3 + $0x18] sm:$0xff]
        %v1124 = vld [vmem:[#allocation3 + $0x20] sm:$0xff]
        %v1125 = vld [vmem:[#allocation3 + $0x28] sm:$0xff]
        %v1126 = vld [vmem:[#allocation3 + $0x30] sm:$0xff]
        %v1127 = vld [vmem:[#allocation3 + $0x38] sm:$0xff]
        %v1128 = vld [vmem:[#allocation3 + $0x40] sm:$0xff]
        %v1129 = vld [vmem:[#allocation3 + $0x48] sm:$0xff]
        %v1130 = vld [vmem:[#allocation3 + $0x50] sm:$0xff]
        %v1131 = vld [vmem:[#allocation3 + $0x58] sm:$0xff]
        %v1132 = vld [vmem:[#allocation3 + $0x60] sm:$0xff]
        %v1133 = vld [vmem:[#allocation3 + $0x68] sm:$0xff]
        %v1134 = vld [vmem:[#allocation3 + $0x70] sm:$0xff]
        %v1135 = vld [vmem:[#allocation3 + $0x78] sm:$0xff]
        %v1136 = vld [vmem:[#allocation3 + $0x80] sm:$0xff]
        %v1137 = vld [vmem:[#allocation3 + $0x88] sm:$0xff]
        %v1138 = vld [vmem:[#allocation3 + $0x90] sm:$0xff]
        %v1139 = vld [vmem:[#allocation3 + $0x98] sm:$0xff]
        %v1140 = vld [vmem:[#allocation3 + $0xa0] sm:$0xff]
        %v1141 = vld [vmem:[#allocation3 + $0xa8] sm:$0xff]
        %v1142 = vld [vmem:[#allocation3 + $0xb0] sm:$0xff]
        %v1143 = vld [vmem:[#allocation3 + $0xb8] sm:$0xff]
        %v1144 = vld [vmem:[#allocation3 + $0xc0] sm:$0xff]
        %v1145 = vld [vmem:[#allocation3 + $0xc8] sm:$0xff]
        %v1146 = vld [vmem:[#allocation3 + $0xd0] sm:$0xff]
        %v1147 = vld [vmem:[#allocation3 + $0xd8] sm:$0xff]
        %v1148 = vld [vmem:[#allocation3 + $0xe0] sm:$0xff]
        %v1149 = vld [vmem:[#allocation3 + $0xe8] sm:$0xff]
        %v1150 = vld [vmem:[#allocation3 + $0xf0] sm:$0xff]
        %v1151 = vld [vmem:[#allocation3 + $0xf8] sm:$0xff]
        %v1152 = vld [vmem:[#allocation3 + $0x100] sm:$0xff]
        %v1153 = vld [vmem:[#allocation3 + $0x108] sm:$0xff]
        %v1154 = vld [vmem:[#allocation3 + $0x110] sm:$0xff]
        %v1155 = vld [vmem:[#allocation3 + $0x118] sm:$0xff]
        %v1156 = vld [vmem:[#allocation3 + $0x120] sm:$0xff]
        %v1157 = vld [vmem:[#allocation3 + $0x128] sm:$0xff]
        %v1158 = vld [vmem:[#allocation3 + $0x130] sm:$0xff]
        %v1159 = vld [vmem:[#allocation3 + $0x138] sm:$0xff]
        %v1160 = vld [vmem:[#allocation3 + $0x140] sm:$0xff]
        %v1161 = vld [vmem:[#allocation3 + $0x148] sm:$0xff]
        %v1162 = vld [vmem:[#allocation3 + $0x150] sm:$0xff]
        %v1163 = vld [vmem:[#allocation3 + $0x158] sm:$0xff]
        %v1164 = vld [vmem:[#allocation3 + $0x160] sm:$0xff]
        %v1165 = vld [vmem:[#allocation3 + $0x168] sm:$0xff]
        %v1166 = vld [vmem:[#allocation3 + $0x170] sm:$0xff]
        %v1167 = vld [vmem:[#allocation3 + $0x178] sm:$0xff]
        %v1168 = vld [vmem:[#allocation3 + $0x180] sm:$0xff]
        %v1169 = vld [vmem:[#allocation3 + $0x188] sm:$0xff]
        %v1170 = vld [vmem:[#allocation3 + $0x190] sm:$0xff]
        %v1171 = vld [vmem:[#allocation3 + $0x198] sm:$0xff]
        %v1172 = vld [vmem:[#allocation3 + $0x1a0] sm:$0xff]
        %v1173 = vld [vmem:[#allocation3 + $0x1a8] sm:$0xff]
        %v1174 = vld [vmem:[%s5] sm:$0xff]
        %v1175 = vld [vmem:[%s5 + $0x8] sm:$0xff]
        %1177 = vset.pattern.permute.xlu0 0
        %1178 = vperm.xlu0 %1177, %v1174
        %v1179 = vpop.permute.xlu0 %1178
        %1182 = vset.pattern.permute.xlu0 0
        %1183 = vperm.xlu0 %1182, %v1175
        %v1184 = vpop.permute.xlu0 %1183
        %vm1186 = vcmask 130048
        %v1188 = vsel %vm1186, %v1117, 0
        %v1191 = vsel %vm1186, %v1119, 0
        %1193 = vmatpush.msra.mxu0 %v1165
        %1194 = vmatpush.msra.mxu0 %v1162
        %1195 = vmatpush.msra.mxu0 %v1159
        %1196 = vmatpush.msra.mxu0 %v1156
        %1197 = vmatpush.msra.mxu0 %v1153
        %1198 = vmatpush.msra.mxu0 %v1150
        %1199 = vmatpush.msra.mxu0 %v1147
        %1200 = vmatpush.msra.mxu0 %v1144
        %1201 = vmatpush.msra.mxu0 %v1141
        %1202 = vmatpush.msra.mxu0 %v1138
        %1203 = vmatpush.msra.mxu0 %v1135
        %1204 = vmatpush.msra.mxu0 %v1132
        %1205 = vmatpush.msra.mxu0 %v1129
        %1206 = vmatpush.msra.mxu0 %v1126
        %1207 = vmatpush.msra.mxu0 %v1123
        %1208 = vmatpush.msra.mxu0 %v1120
        %1209 = vmatmul.f32.gmra.mxu0 %v1116
        %v1210 = vpop.f32.mrf.mxu0
        %v1211 = vadd.f32 %v1179, %v1210
        %1212 = vmatmul.f32.gmra.mxu0 %v1118
        %v1213 = vpop.f32.mrf.mxu0
        %v1214 = vadd.f32 %v1184, %v1213
        %1215 = vdwg.mxu0
        %1216 = vmatpush.msra.mxu0 0.0
        %1217 = vmatpush.msra.mxu0 0.0
        %1218 = vmatpush.msra.mxu0 0.0
        %1219 = vmatpush.msra.mxu0 0.0
        %1220 = vmatpush.msra.mxu0 0.0
        %1221 = vmatpush.msra.mxu0 0.0
        %1222 = vmatpush.msra.mxu0 0.0
        %1223 = vmatpush.msra.mxu0 0.0
        %1224 = vmatpush.msra.mxu0 0.0
        %1225 = vmatpush.msra.mxu0 0.0
        %1226 = vmatpush.msra.mxu0 0.0
        %1227 = vmatpush.msra.mxu0 0.0
        %1228 = vmatpush.msra.mxu0 0.0
        %1229 = vmatpush.msra.mxu0 0.0
        %1230 = vmatpush.msra.mxu0 %v1171
        %1231 = vmatpush.msra.mxu0 %v1168
        %1232 = vmatmul.f32.gmra.mxu0 %v1188
        %v1233 = vpop.f32.mrf.mxu0
        %v1234 = vadd.f32 %v1211, %v1233
        %1235 = vmatmul.f32.gmra.mxu0 %v1191
        %v1236 = vpop.f32.mrf.mxu0
        %v1237 = vadd.f32 %v1214, %v1236
        %1238 = vdwg.mxu0
        %1239 = vmatpush.msra.mxu0 %v1166
        %1240 = vmatpush.msra.mxu0 %v1163
        %1241 = vmatpush.msra.mxu0 %v1160
        %1242 = vmatpush.msra.mxu0 %v1157
        %1243 = vmatpush.msra.mxu0 %v1154
        %1244 = vmatpush.msra.mxu0 %v1151
        %1245 = vmatpush.msra.mxu0 %v1148
        %1246 = vmatpush.msra.mxu0 %v1145
        %1247 = vmatpush.msra.mxu0 %v1142
        %1248 = vmatpush.msra.mxu0 %v1139
        %1249 = vmatpush.msra.mxu0 %v1136
        %1250 = vmatpush.msra.mxu0 %v1133
        %1251 = vmatpush.msra.mxu0 %v1130
        %1252 = vmatpush.msra.mxu0 %v1127
        %1253 = vmatpush.msra.mxu0 %v1124
        %1254 = vmatpush.msra.mxu0 %v1121
        %1255 = vmatmul.f32.gmra.mxu0 %v1116
        %v1256 = vpop.f32.mrf.mxu0
        %v1257 = vadd.f32 %v1179, %v1256
        %1258 = vmatmul.f32.gmra.mxu0 %v1118
        %v1259 = vpop.f32.mrf.mxu0
        %v1260 = vadd.f32 %v1184, %v1259
        %1261 = vdwg.mxu0
        %1262 = vmatpush.msra.mxu0 0.0
        %1263 = vmatpush.msra.mxu0 0.0
        %1264 = vmatpush.msra.mxu0 0.0
        %1265 = vmatpush.msra.mxu0 0.0
        %1266 = vmatpush.msra.mxu0 0.0
        %1267 = vmatpush.msra.mxu0 0.0
        %1268 = vmatpush.msra.mxu0 0.0
        %1269 = vmatpush.msra.mxu0 0.0
        %1270 = vmatpush.msra.mxu0 0.0
        %1271 = vmatpush.msra.mxu0 0.0
        %1272 = vmatpush.msra.mxu0 0.0
        %1273 = vmatpush.msra.mxu0 0.0
        %1274 = vmatpush.msra.mxu0 0.0
        %1275 = vmatpush.msra.mxu0 0.0
        %1276 = vmatpush.msra.mxu0 %v1172
        %1277 = vmatpush.msra.mxu0 %v1169
        %1278 = vmatmul.f32.gmra.mxu0 %v1188
        %v1279 = vpop.f32.mrf.mxu0
        %v1280 = vadd.f32 %v1257, %v1279
        %1281 = vmatmul.f32.gmra.mxu0 %v1191
        %v1282 = vpop.f32.mrf.mxu0
        %v1283 = vadd.f32 %v1260, %v1282
        %1284 = vdwg.mxu0
        %1285 = vmatpush.msra.mxu0 %v1167
        %1286 = vmatpush.msra.mxu0 %v1164
        %1287 = vmatpush.msra.mxu0 %v1161
        %1288 = vmatpush.msra.mxu0 %v1158
        %1289 = vmatpush.msra.mxu0 %v1155
        %1290 = vmatpush.msra.mxu0 %v1152
        %1291 = vmatpush.msra.mxu0 %v1149
        %1292 = vmatpush.msra.mxu0 %v1146
        %1293 = vmatpush.msra.mxu0 %v1143
        %1294 = vmatpush.msra.mxu0 %v1140
        %1295 = vmatpush.msra.mxu0 %v1137
        %1296 = vmatpush.msra.mxu0 %v1134
        %1297 = vmatpush.msra.mxu0 %v1131
        %1298 = vmatpush.msra.mxu0 %v1128
        %1299 = vmatpush.msra.mxu0 %v1125
        %1300 = vmatpush.msra.mxu0 %v1122
        %1301 = vmatmul.f32.gmra.mxu0 %v1116
        %v1302 = vpop.f32.mrf.mxu0
        %v1303 = vadd.f32 %v1179, %v1302
        %1304 = vmatmul.f32.gmra.mxu0 %v1118
        %v1305 = vpop.f32.mrf.mxu0
        %v1306 = vadd.f32 %v1184, %v1305
        %1307 = vdwg.mxu0
        %1308 = vmatpush.msra.mxu0 0.0
        %1309 = vmatpush.msra.mxu0 0.0
        %1310 = vmatpush.msra.mxu0 0.0
        %1311 = vmatpush.msra.mxu0 0.0
        %1312 = vmatpush.msra.mxu0 0.0
        %1313 = vmatpush.msra.mxu0 0.0
        %1314 = vmatpush.msra.mxu0 0.0
        %1315 = vmatpush.msra.mxu0 0.0
        %1316 = vmatpush.msra.mxu0 0.0
        %1317 = vmatpush.msra.mxu0 0.0
        %1318 = vmatpush.msra.mxu0 0.0
        %1319 = vmatpush.msra.mxu0 0.0
        %1320 = vmatpush.msra.mxu0 0.0
        %1321 = vmatpush.msra.mxu0 0.0
        %1322 = vmatpush.msra.mxu0 %v1173
        %1323 = vmatpush.msra.mxu0 %v1170
        %1324 = vmatmul.f32.gmra.mxu0 %v1188
        %v1325 = vpop.f32.mrf.mxu0
        %v1326 = vadd.f32 %v1303, %v1325
        %1327 = vmatmul.f32.gmra.mxu0 %v1191
        %v1328 = vpop.f32.mrf.mxu0
        %v1329 = vadd.f32 %v1306, %v1328
        %1330 = vdwg.mxu0
        %v1331 = vmax.f32 %v1234, 0.0
        %v1332 = vmax.f32 %v1280, 0.0
        %v1333 = vmax.f32 %v1326, 0.0
        %v1334 = vmax.f32 %v1237, 0.0
        %v1335 = vmax.f32 %v1283, 0.0
        %v1336 = vmax.f32 %v1329, 0.0
        %v1337 = vmul.f32 %v1331, %v682
        %v1338 = vmul.f32 %v1332, %v683
        %v1339 = vmul.f32 %v1333, %v684
        %v1340 = vmul.f32 %v1334, %v682
        %v1341 = vmul.f32 %v1335, %v683
        %v1342 = vmul.f32 %v1336, %v684
        %1343 = vst [vmem:[#allocation6 + $0x8] sm:$0xff] %v1337
        %1344 = vst [vmem:[#allocation6 + $0x10] sm:$0xff] %v1338
        %1345 = vst [vmem:[#allocation6 + $0x18] sm:$0xff] %v1339
        %1346 = vst [vmem:[#allocation6 + $0x30] sm:$0xff] %v1340
        %1347 = vst [vmem:[#allocation6 + $0x38] sm:$0xff] %v1341
        %1348 = vst [vmem:[#allocation6 + $0x40] sm:$0xff] %v1342
        %1349 = vst [vmem:[#allocation6] sm:$0xff] 0.0
        %1350 = vst [vmem:[#allocation6 + $0x28] sm:$0xff] 0.0
        %1351 = vst [vmem:[#allocation6 + $0x20] sm:$0xff] 0.0
        %1352 = vst [vmem:[#allocation6 + $0x48] sm:$0xff] 0.0
        %v1353 = vld [vmem:[#allocation6] sm:$0xff]
        %v1354 = vld [vmem:[#allocation6 + $0x8] sm:$0xff]
        %v1355 = vld [vmem:[#allocation6 + $0x10] sm:$0xff]
        %v1356 = vld [vmem:[#allocation6 + $0x18] sm:$0xff]
        %v1357 = vld [vmem:[#allocation6 + $0x28] sm:$0xff]
        %v1358 = vld [vmem:[#allocation6 + $0x30] sm:$0xff]
        %v1359 = vld [vmem:[#allocation6 + $0x38] sm:$0xff]
        %v1360 = vld [vmem:[#allocation6 + $0x40] sm:$0xff]
        %1369 = vrot.lane.b32.xlu0 %v1353, 19
        %v1370 = vpop.permute.xlu0 %1369
        %1371 = vrot.lane.b32.xlu0 %v1354, 19
        %v1372 = vpop.permute.xlu0 %1371
        %1373 = vrot.lane.b32.xlu0 %v1355, 19
        %v1374 = vpop.permute.xlu0 %1373
        %1375 = vrot.lane.b32.xlu0 %v1356, 19
        %v1376 = vpop.permute.xlu0 %1375
        %1377 = vrot.lane.b32.xlu0 %v1357, 19
        %v1378 = vpop.permute.xlu0 %1377
        %1379 = vrot.lane.b32.xlu0 %v1358, 19
        %v1380 = vpop.permute.xlu0 %1379
        %1381 = vrot.lane.b32.xlu0 %v1359, 19
        %v1382 = vpop.permute.xlu0 %1381
        %1383 = vrot.lane.b32.xlu0 %v1360, 19
        %v1384 = vpop.permute.xlu0 %1383
        %v1385 = vsel %vm360, %v1370, %v1372
        %v1386 = vsel %vm360, %v1372, %v1374
        %v1387 = vsel %vm360, %v1374, %v1376
        %v1388 = vsel %vm360, %v1378, %v1380
        %v1389 = vsel %vm360, %v1380, %v1382
        %v1390 = vsel %vm360, %v1382, %v1384
        %1397 = vst [vmem:[#allocation4] sm:$0xff] %v1385
        %1398 = vst [vmem:[#allocation4 + $0x8] sm:$0xff] %v1386
        %1399 = vst [vmem:[#allocation4 + $0x10] sm:$0xff] %v1387
        %1400 = vst [vmem:[#allocation4 + $0x18] sm:$0xff] %v1388
        %1401 = vst [vmem:[#allocation4 + $0x20] sm:$0xff] %v1389
        %1402 = vst [vmem:[#allocation4 + $0x28] sm:$0xff] %v1390
        %v1403 = vld [vmem:[#allocation6] sm:$0xff]
        %v1404 = vld [vmem:[#allocation6 + $0x8] sm:$0xff]
        %v1405 = vld [vmem:[#allocation6 + $0x10] sm:$0xff]
        %v1406 = vld [vmem:[#allocation6 + $0x18] sm:$0xff]
        %v1407 = vld [vmem:[#allocation6 + $0x28] sm:$0xff]
        %v1408 = vld [vmem:[#allocation6 + $0x30] sm:$0xff]
        %v1409 = vld [vmem:[#allocation6 + $0x38] sm:$0xff]
        %v1410 = vld [vmem:[#allocation6 + $0x40] sm:$0xff]
        %1419 = vrot.lane.b32.xlu0 %v1403, 18
        %v1420 = vpop.permute.xlu0 %1419
        %1421 = vrot.lane.b32.xlu0 %v1404, 18
        %v1422 = vpop.permute.xlu0 %1421
        %1423 = vrot.lane.b32.xlu0 %v1405, 18
        %v1424 = vpop.permute.xlu0 %1423
        %1425 = vrot.lane.b32.xlu0 %v1406, 18
        %v1426 = vpop.permute.xlu0 %1425
        %1427 = vrot.lane.b32.xlu0 %v1407, 18
        %v1428 = vpop.permute.xlu0 %1427
        %1429 = vrot.lane.b32.xlu0 %v1408, 18
        %v1430 = vpop.permute.xlu0 %1429
        %1431 = vrot.lane.b32.xlu0 %v1409, 18
        %v1432 = vpop.permute.xlu0 %1431
        %1433 = vrot.lane.b32.xlu0 %v1410, 18
        %v1434 = vpop.permute.xlu0 %1433
        %v1435 = vsel %vm386, %v1420, %v1422
        %v1436 = vsel %vm386, %v1422, %v1424
        %v1437 = vsel %vm386, %v1424, %v1426
        %v1438 = vsel %vm386, %v1428, %v1430
        %v1439 = vsel %vm386, %v1430, %v1432
        %v1440 = vsel %vm386, %v1432, %v1434
        %1447 = vst [vmem:[#allocation4 + $0x30] sm:$0xff] %v1435
        %1448 = vst [vmem:[#allocation4 + $0x38] sm:$0xff] %v1436
        %1449 = vst [vmem:[#allocation4 + $0x40] sm:$0xff] %v1437
        %1450 = vst [vmem:[#allocation4 + $0x48] sm:$0xff] %v1438
        %1451 = vst [vmem:[#allocation4 + $0x50] sm:$0xff] %v1439
        %1452 = vst [vmem:[#allocation4 + $0x58] sm:$0xff] %v1440
        %v1453 = vld [vmem:[#allocation6] sm:$0xff]
        %v1454 = vld [vmem:[#allocation6 + $0x8] sm:$0xff]
        %v1455 = vld [vmem:[#allocation6 + $0x10] sm:$0xff]
        %v1456 = vld [vmem:[#allocation6 + $0x18] sm:$0xff]
        %v1457 = vld [vmem:[#allocation6 + $0x28] sm:$0xff]
        %v1458 = vld [vmem:[#allocation6 + $0x30] sm:$0xff]
        %v1459 = vld [vmem:[#allocation6 + $0x38] sm:$0xff]
        %v1460 = vld [vmem:[#allocation6 + $0x40] sm:$0xff]
        %1469 = vrot.lane.b32.xlu0 %v1453, 17
        %v1470 = vpop.permute.xlu0 %1469
        %1471 = vrot.lane.b32.xlu0 %v1454, 17
        %v1472 = vpop.permute.xlu0 %1471
        %1473 = vrot.lane.b32.xlu0 %v1455, 17
        %v1474 = vpop.permute.xlu0 %1473
        %1475 = vrot.lane.b32.xlu0 %v1456, 17
        %v1476 = vpop.permute.xlu0 %1475
        %1477 = vrot.lane.b32.xlu0 %v1457, 17
        %v1478 = vpop.permute.xlu0 %1477
        %1479 = vrot.lane.b32.xlu0 %v1458, 17
        %v1480 = vpop.permute.xlu0 %1479
        %1481 = vrot.lane.b32.xlu0 %v1459, 17
        %v1482 = vpop.permute.xlu0 %1481
        %1483 = vrot.lane.b32.xlu0 %v1460, 17
        %v1484 = vpop.permute.xlu0 %1483
        %v1485 = vsel %vm412, %v1470, %v1472
        %v1486 = vsel %vm412, %v1472, %v1474
        %v1487 = vsel %vm412, %v1474, %v1476
        %v1488 = vsel %vm412, %v1478, %v1480
        %v1489 = vsel %vm412, %v1480, %v1482
        %v1490 = vsel %vm412, %v1482, %v1484
        %1497 = vst [vmem:[#allocation4 + $0x60] sm:$0xff] %v1485
        %1498 = vst [vmem:[#allocation4 + $0x68] sm:$0xff] %v1486
        %1499 = vst [vmem:[#allocation4 + $0x70] sm:$0xff] %v1487
        %1500 = vst [vmem:[#allocation4 + $0x78] sm:$0xff] %v1488
        %1501 = vst [vmem:[#allocation4 + $0x80] sm:$0xff] %v1489
        %1502 = vst [vmem:[#allocation4 + $0x88] sm:$0xff] %v1490
        %v1503 = vld [vmem:[#allocation6] sm:$0xff]
        %v1504 = vld [vmem:[#allocation6 + $0x8] sm:$0xff]
        %v1505 = vld [vmem:[#allocation6 + $0x10] sm:$0xff]
        %v1506 = vld [vmem:[#allocation6 + $0x18] sm:$0xff]
        %v1507 = vld [vmem:[#allocation6 + $0x28] sm:$0xff]
        %v1508 = vld [vmem:[#allocation6 + $0x30] sm:$0xff]
        %v1509 = vld [vmem:[#allocation6 + $0x38] sm:$0xff]
        %v1510 = vld [vmem:[#allocation6 + $0x40] sm:$0xff]
        %1519 = vrot.lane.b32.xlu0 %v1503, 1
        %v1520 = vpop.permute.xlu0 %1519
        %1521 = vrot.lane.b32.xlu0 %v1504, 1
        %v1522 = vpop.permute.xlu0 %1521
        %1523 = vrot.lane.b32.xlu0 %v1505, 1
        %v1524 = vpop.permute.xlu0 %1523
        %1525 = vrot.lane.b32.xlu0 %v1506, 1
        %v1526 = vpop.permute.xlu0 %1525
        %1527 = vrot.lane.b32.xlu0 %v1507, 1
        %v1528 = vpop.permute.xlu0 %1527
        %1529 = vrot.lane.b32.xlu0 %v1508, 1
        %v1530 = vpop.permute.xlu0 %1529
        %1531 = vrot.lane.b32.xlu0 %v1509, 1
        %v1532 = vpop.permute.xlu0 %1531
        %1533 = vrot.lane.b32.xlu0 %v1510, 1
        %v1534 = vpop.permute.xlu0 %1533
        %v1535 = vsel %vm438, %v1520, %v1522
        %v1536 = vsel %vm438, %v1522, %v1524
        %v1537 = vsel %vm438, %v1524, %v1526
        %v1538 = vsel %vm438, %v1528, %v1530
        %v1539 = vsel %vm438, %v1530, %v1532
        %v1540 = vsel %vm438, %v1532, %v1534
        %1547 = vst [vmem:[#allocation4 + $0x90] sm:$0xff] %v1535
        %1548 = vst [vmem:[#allocation4 + $0x98] sm:$0xff] %v1536
        %1549 = vst [vmem:[#allocation4 + $0xa0] sm:$0xff] %v1537
        %1550 = vst [vmem:[#allocation4 + $0xa8] sm:$0xff] %v1538
        %1551 = vst [vmem:[#allocation4 + $0xb0] sm:$0xff] %v1539
        %1552 = vst [vmem:[#allocation4 + $0xb8] sm:$0xff] %v1540
        %v1553 = vld [vmem:[#allocation6 + $0x8] sm:$0xff]
        %v1554 = vld [vmem:[#allocation6 + $0x10] sm:$0xff]
        %v1555 = vld [vmem:[#allocation6 + $0x18] sm:$0xff]
        %v1556 = vld [vmem:[#allocation6 + $0x30] sm:$0xff]
        %v1557 = vld [vmem:[#allocation6 + $0x38] sm:$0xff]
        %v1558 = vld [vmem:[#allocation6 + $0x40] sm:$0xff]
        %1559 = vst [vmem:[#allocation4 + $0xc0] sm:$0xff] %v1553
        %1560 = vst [vmem:[#allocation4 + $0xc8] sm:$0xff] %v1554
        %1561 = vst [vmem:[#allocation4 + $0xd0] sm:$0xff] %v1555
        %1562 = vst [vmem:[#allocation4 + $0xd8] sm:$0xff] %v1556
        %1563 = vst [vmem:[#allocation4 + $0xe0] sm:$0xff] %v1557
        %1564 = vst [vmem:[#allocation4 + $0xe8] sm:$0xff] %v1558
        %v1565 = vld [vmem:[#allocation6 + $0x8] sm:$0xff]
        %v1566 = vld [vmem:[#allocation6 + $0x10] sm:$0xff]
        %v1567 = vld [vmem:[#allocation6 + $0x18] sm:$0xff]
        %v1568 = vld [vmem:[#allocation6 + $0x20] sm:$0xff]
        %v1569 = vld [vmem:[#allocation6 + $0x30] sm:$0xff]
        %v1570 = vld [vmem:[#allocation6 + $0x38] sm:$0xff]
        %v1571 = vld [vmem:[#allocation6 + $0x40] sm:$0xff]
        %v1572 = vld [vmem:[#allocation6 + $0x48] sm:$0xff]
        %1581 = vrot.lane.b32.xlu0 %v1565, 127
        %v1582 = vpop.permute.xlu0 %1581
        %1583 = vrot.lane.b32.xlu0 %v1566, 127
        %v1584 = vpop.permute.xlu0 %1583
        %1585 = vrot.lane.b32.xlu0 %v1567, 127
        %v1586 = vpop.permute.xlu0 %1585
        %1587 = vrot.lane.b32.xlu0 %v1568, 127
        %v1588 = vpop.permute.xlu0 %1587
        %1589 = vrot.lane.b32.xlu0 %v1569, 127
        %v1590 = vpop.permute.xlu0 %1589
        %1591 = vrot.lane.b32.xlu0 %v1570, 127
        %v1592 = vpop.permute.xlu0 %1591
        %1593 = vrot.lane.b32.xlu0 %v1571, 127
        %v1594 = vpop.permute.xlu0 %1593
        %1595 = vrot.lane.b32.xlu0 %v1572, 127
        %v1596 = vpop.permute.xlu0 %1595
        %v1597 = vsel %vm470, %v1582, %v1584
        %v1598 = vsel %vm470, %v1584, %v1586
        %v1599 = vsel %vm470, %v1586, %v1588
        %v1600 = vsel %vm470, %v1590, %v1592
        %v1601 = vsel %vm470, %v1592, %v1594
        %v1602 = vsel %vm470, %v1594, %v1596
        %1609 = vst [vmem:[#allocation4 + $0xf0] sm:$0xff] %v1597
        %1610 = vst [vmem:[#allocation4 + $0xf8] sm:$0xff] %v1598
        %1611 = vst [vmem:[#allocation4 + $0x100] sm:$0xff] %v1599
        %1612 = vst [vmem:[#allocation4 + $0x108] sm:$0xff] %v1600
        %1613 = vst [vmem:[#allocation4 + $0x110] sm:$0xff] %v1601
        %1614 = vst [vmem:[#allocation4 + $0x118] sm:$0xff] %v1602
        %v1615 = vld [vmem:[#allocation6 + $0x8] sm:$0xff]
        %v1616 = vld [vmem:[#allocation6 + $0x10] sm:$0xff]
        %v1617 = vld [vmem:[#allocation6 + $0x18] sm:$0xff]
        %v1618 = vld [vmem:[#allocation6 + $0x20] sm:$0xff]
        %v1619 = vld [vmem:[#allocation6 + $0x30] sm:$0xff]
        %v1620 = vld [vmem:[#allocation6 + $0x38] sm:$0xff]
        %v1621 = vld [vmem:[#allocation6 + $0x40] sm:$0xff]
        %v1622 = vld [vmem:[#allocation6 + $0x48] sm:$0xff]
        %1631 = vrot.lane.b32.xlu0 %v1615, 111
        %v1632 = vpop.permute.xlu0 %1631
        %1633 = vrot.lane.b32.xlu0 %v1616, 111
        %v1634 = vpop.permute.xlu0 %1633
        %1635 = vrot.lane.b32.xlu0 %v1617, 111
        %v1636 = vpop.permute.xlu0 %1635
        %1637 = vrot.lane.b32.xlu0 %v1618, 111
        %v1638 = vpop.permute.xlu0 %1637
        %1639 = vrot.lane.b32.xlu0 %v1619, 111
        %v1640 = vpop.permute.xlu0 %1639
        %1641 = vrot.lane.b32.xlu0 %v1620, 111
        %v1642 = vpop.permute.xlu0 %1641
        %1643 = vrot.lane.b32.xlu0 %v1621, 111
        %v1644 = vpop.permute.xlu0 %1643
        %1645 = vrot.lane.b32.xlu0 %v1622, 111
        %v1646 = vpop.permute.xlu0 %1645
        %v1647 = vsel %vm496, %v1632, %v1634
        %v1648 = vsel %vm496, %v1634, %v1636
        %v1649 = vsel %vm496, %v1636, %v1638
        %v1650 = vsel %vm496, %v1640, %v1642
        %v1651 = vsel %vm496, %v1642, %v1644
        %v1652 = vsel %vm496, %v1644, %v1646
        %1659 = vst [vmem:[#allocation4 + $0x120] sm:$0xff] %v1647
        %1660 = vst [vmem:[#allocation4 + $0x128] sm:$0xff] %v1648
        %1661 = vst [vmem:[#allocation4 + $0x130] sm:$0xff] %v1649
        %1662 = vst [vmem:[#allocation4 + $0x138] sm:$0xff] %v1650
        %1663 = vst [vmem:[#allocation4 + $0x140] sm:$0xff] %v1651
        %1664 = vst [vmem:[#allocation4 + $0x148] sm:$0xff] %v1652
        %v1665 = vld [vmem:[#allocation6 + $0x8] sm:$0xff]
        %v1666 = vld [vmem:[#allocation6 + $0x10] sm:$0xff]
        %v1667 = vld [vmem:[#allocation6 + $0x18] sm:$0xff]
        %v1668 = vld [vmem:[#allocation6 + $0x20] sm:$0xff]
        %v1669 = vld [vmem:[#allocation6 + $0x30] sm:$0xff]
        %v1670 = vld [vmem:[#allocation6 + $0x38] sm:$0xff]
        %v1671 = vld [vmem:[#allocation6 + $0x40] sm:$0xff]
        %v1672 = vld [vmem:[#allocation6 + $0x48] sm:$0xff]
        %1681 = vrot.lane.b32.xlu0 %v1665, 110
        %v1682 = vpop.permute.xlu0 %1681
        %1683 = vrot.lane.b32.xlu0 %v1666, 110
        %v1684 = vpop.permute.xlu0 %1683
        %1685 = vrot.lane.b32.xlu0 %v1667, 110
        %v1686 = vpop.permute.xlu0 %1685
        %1687 = vrot.lane.b32.xlu0 %v1668, 110
        %v1688 = vpop.permute.xlu0 %1687
        %1689 = vrot.lane.b32.xlu0 %v1669, 110
        %v1690 = vpop.permute.xlu0 %1689
        %1691 = vrot.lane.b32.xlu0 %v1670, 110
        %v1692 = vpop.permute.xlu0 %1691
        %1693 = vrot.lane.b32.xlu0 %v1671, 110
        %v1694 = vpop.permute.xlu0 %1693
        %1695 = vrot.lane.b32.xlu0 %v1672, 110
        %v1696 = vpop.permute.xlu0 %1695
        %v1697 = vsel %vm522, %v1682, %v1684
        %v1698 = vsel %vm522, %v1684, %v1686
        %v1699 = vsel %vm522, %v1686, %v1688
        %v1700 = vsel %vm522, %v1690, %v1692
        %v1701 = vsel %vm522, %v1692, %v1694
        %v1702 = vsel %vm522, %v1694, %v1696
        %1709 = vst [vmem:[#allocation4 + $0x150] sm:$0xff] %v1697
        %1710 = vst [vmem:[#allocation4 + $0x158] sm:$0xff] %v1698
        %1711 = vst [vmem:[#allocation4 + $0x160] sm:$0xff] %v1699
        %1712 = vst [vmem:[#allocation4 + $0x168] sm:$0xff] %v1700
        %1713 = vst [vmem:[#allocation4 + $0x170] sm:$0xff] %v1701
        %1714 = vst [vmem:[#allocation4 + $0x178] sm:$0xff] %v1702
        %v1715 = vld [vmem:[#allocation6 + $0x8] sm:$0xff]
        %v1716 = vld [vmem:[#allocation6 + $0x10] sm:$0xff]
        %v1717 = vld [vmem:[#allocation6 + $0x18] sm:$0xff]
        %v1718 = vld [vmem:[#allocation6 + $0x20] sm:$0xff]
        %v1719 = vld [vmem:[#allocation6 + $0x30] sm:$0xff]
        %v1720 = vld [vmem:[#allocation6 + $0x38] sm:$0xff]
        %v1721 = vld [vmem:[#allocation6 + $0x40] sm:$0xff]
        %v1722 = vld [vmem:[#allocation6 + $0x48] sm:$0xff]
        %1731 = vrot.lane.b32.xlu0 %v1715, 109
        %v1732 = vpop.permute.xlu0 %1731
        %1733 = vrot.lane.b32.xlu0 %v1716, 109
        %v1734 = vpop.permute.xlu0 %1733
        %1735 = vrot.lane.b32.xlu0 %v1717, 109
        %v1736 = vpop.permute.xlu0 %1735
        %1737 = vrot.lane.b32.xlu0 %v1718, 109
        %v1738 = vpop.permute.xlu0 %1737
        %1739 = vrot.lane.b32.xlu0 %v1719, 109
        %v1740 = vpop.permute.xlu0 %1739
        %1741 = vrot.lane.b32.xlu0 %v1720, 109
        %v1742 = vpop.permute.xlu0 %1741
        %1743 = vrot.lane.b32.xlu0 %v1721, 109
        %v1744 = vpop.permute.xlu0 %1743
        %1745 = vrot.lane.b32.xlu0 %v1722, 109
        %v1746 = vpop.permute.xlu0 %1745
        %v1747 = vsel %vm548, %v1732, %v1734
        %v1748 = vsel %vm548, %v1734, %v1736
        %v1749 = vsel %vm548, %v1736, %v1738
        %v1750 = vsel %vm548, %v1740, %v1742
        %v1751 = vsel %vm548, %v1742, %v1744
        %v1752 = vsel %vm548, %v1744, %v1746
        %1759 = vst [vmem:[#allocation4 + $0x180] sm:$0xff] %v1747
        %1760 = vst [vmem:[#allocation4 + $0x188] sm:$0xff] %v1748
        %1761 = vst [vmem:[#allocation4 + $0x190] sm:$0xff] %v1749
        %1762 = vst [vmem:[#allocation4 + $0x198] sm:$0xff] %v1750
        %1763 = vst [vmem:[#allocation4 + $0x1a0] sm:$0xff] %v1751
        %1764 = vst [vmem:[#allocation4 + $0x1a8] sm:$0xff] %v1752
        %v1765 = vld [vmem:[%s6] sm:$0x3]
        %v1766 = vld [vmem:[#allocation4] sm:$0xff]
        %v1767 = vld [vmem:[#allocation4 + $0x8] sm:$0xff]
        %v1768 = vld [vmem:[#allocation4 + $0x10] sm:$0xff]
        %v1769 = vld [vmem:[#allocation4 + $0x18] sm:$0xff]
        %v1770 = vld [vmem:[#allocation4 + $0x20] sm:$0xff]
        %v1771 = vld [vmem:[#allocation4 + $0x28] sm:$0xff]
        %v1772 = vld [vmem:[#allocation4 + $0x30] sm:$0xff]
        %v1773 = vld [vmem:[#allocation4 + $0x38] sm:$0xff]
        %v1774 = vld [vmem:[#allocation4 + $0x40] sm:$0xff]
        %v1775 = vld [vmem:[#allocation4 + $0x48] sm:$0xff]
        %v1776 = vld [vmem:[#allocation4 + $0x50] sm:$0xff]
        %v1777 = vld [vmem:[#allocation4 + $0x58] sm:$0xff]
        %v1778 = vld [vmem:[#allocation4 + $0x60] sm:$0xff]
        %v1779 = vld [vmem:[#allocation4 + $0x68] sm:$0xff]
        %v1780 = vld [vmem:[#allocation4 + $0x70] sm:$0xff]
        %v1781 = vld [vmem:[#allocation4 + $0x78] sm:$0xff]
        %v1782 = vld [vmem:[#allocation4 + $0x80] sm:$0xff]
        %v1783 = vld [vmem:[#allocation4 + $0x88] sm:$0xff]
        %v1784 = vld [vmem:[#allocation4 + $0x90] sm:$0xff]
        %v1785 = vld [vmem:[#allocation4 + $0x98] sm:$0xff]
        %v1786 = vld [vmem:[#allocation4 + $0xa0] sm:$0xff]
        %v1787 = vld [vmem:[#allocation4 + $0xa8] sm:$0xff]
        %v1788 = vld [vmem:[#allocation4 + $0xb0] sm:$0xff]
        %v1789 = vld [vmem:[#allocation4 + $0xb8] sm:$0xff]
        %v1790 = vld [vmem:[#allocation4 + $0xc0] sm:$0xff]
        %v1791 = vld [vmem:[#allocation4 + $0xc8] sm:$0xff]
        %v1792 = vld [vmem:[#allocation4 + $0xd0] sm:$0xff]
        %v1793 = vld [vmem:[#allocation4 + $0xd8] sm:$0xff]
        %v1794 = vld [vmem:[#allocation4 + $0xe0] sm:$0xff]
        %v1795 = vld [vmem:[#allocation4 + $0xe8] sm:$0xff]
        %v1796 = vld [vmem:[#allocation4 + $0xf0] sm:$0xff]
        %v1797 = vld [vmem:[#allocation4 + $0xf8] sm:$0xff]
        %v1798 = vld [vmem:[#allocation4 + $0x100] sm:$0xff]
        %v1799 = vld [vmem:[#allocation4 + $0x108] sm:$0xff]
        %v1800 = vld [vmem:[#allocation4 + $0x110] sm:$0xff]
        %v1801 = vld [vmem:[#allocation4 + $0x118] sm:$0xff]
        %v1802 = vld [vmem:[#allocation4 + $0x120] sm:$0xff]
        %v1803 = vld [vmem:[#allocation4 + $0x128] sm:$0xff]
        %v1804 = vld [vmem:[#allocation4 + $0x130] sm:$0xff]
        %v1805 = vld [vmem:[#allocation4 + $0x138] sm:$0xff]
        %v1806 = vld [vmem:[#allocation4 + $0x140] sm:$0xff]
        %v1807 = vld [vmem:[#allocation4 + $0x148] sm:$0xff]
        %v1808 = vld [vmem:[#allocation4 + $0x150] sm:$0xff]
        %v1809 = vld [vmem:[#allocation4 + $0x158] sm:$0xff]
        %v1810 = vld [vmem:[#allocation4 + $0x160] sm:$0xff]
        %v1811 = vld [vmem:[#allocation4 + $0x168] sm:$0xff]
        %v1812 = vld [vmem:[#allocation4 + $0x170] sm:$0xff]
        %v1813 = vld [vmem:[#allocation4 + $0x178] sm:$0xff]
        %v1814 = vld [vmem:[#allocation4 + $0x180] sm:$0xff]
        %v1815 = vld [vmem:[#allocation4 + $0x188] sm:$0xff]
        %v1816 = vld [vmem:[#allocation4 + $0x190] sm:$0xff]
        %v1817 = vld [vmem:[#allocation4 + $0x198] sm:$0xff]
        %v1818 = vld [vmem:[#allocation4 + $0x1a0] sm:$0xff]
        %v1819 = vld [vmem:[#allocation4 + $0x1a8] sm:$0xff]
        %v1820 = vld [vmem:[#allocation7] sm:$0x1]
        %1822 = vset.pattern.permute.xlu0 0
        %1823 = vperm.xlu0 %1822, %v1820
        %v1824 = vpop.permute.xlu0 %1823
        %v1826 = vperm.slane %v1824, 0
        %v1828 = vperm.slane %v1765, 0
        %v1829 = vperm.slane %v1765, 1
        %v1831 = vsel %vm1186, %v1829, 0
        %1833 = vmatpush.msra.mxu0 %v1811
        %1834 = vmatpush.msra.mxu0 %v1808
        %1835 = vmatpush.msra.mxu0 %v1805
        %1836 = vmatpush.msra.mxu0 %v1802
        %1837 = vmatpush.msra.mxu0 %v1799
        %1838 = vmatpush.msra.mxu0 %v1796
        %1839 = vmatpush.msra.mxu0 %v1793
        %1840 = vmatpush.msra.mxu0 %v1790
        %1841 = vmatpush.msra.mxu0 %v1787
        %1842 = vmatpush.msra.mxu0 %v1784
        %1843 = vmatpush.msra.mxu0 %v1781
        %1844 = vmatpush.msra.mxu0 %v1778
        %1845 = vmatpush.msra.mxu0 %v1775
        %1846 = vmatpush.msra.mxu0 %v1772
        %1847 = vmatpush.msra.mxu0 %v1769
        %1848 = vmatpush.msra.mxu0 %v1766
        %1849 = vmatmul.f32.gmra.mxu0 %v1828
        %v1850 = vpop.f32.mrf.mxu0
        %v1851 = vadd.f32 %v1826, %v1850
        %1852 = vdwg.mxu0
        %1853 = vmatpush.msra.mxu0 0.0
        %1854 = vmatpush.msra.mxu0 0.0
        %1855 = vmatpush.msra.mxu0 0.0
        %1856 = vmatpush.msra.mxu0 0.0
        %1857 = vmatpush.msra.mxu0 0.0
        %1858 = vmatpush.msra.mxu0 0.0
        %1859 = vmatpush.msra.mxu0 0.0
        %1860 = vmatpush.msra.mxu0 0.0
        %1861 = vmatpush.msra.mxu0 0.0
        %1862 = vmatpush.msra.mxu0 0.0
        %1863 = vmatpush.msra.mxu0 0.0
        %1864 = vmatpush.msra.mxu0 0.0
        %1865 = vmatpush.msra.mxu0 0.0
        %1866 = vmatpush.msra.mxu0 0.0
        %1867 = vmatpush.msra.mxu0 %v1817
        %1868 = vmatpush.msra.mxu0 %v1814
        %1869 = vmatmul.f32.gmra.mxu0 %v1831
        %v1870 = vpop.f32.mrf.mxu0
        %v1871 = vadd.f32 %v1851, %v1870
        %1872 = vdwg.mxu0
        %1873 = vmatpush.msra.mxu0 %v1812
        %1874 = vmatpush.msra.mxu0 %v1809
        %1875 = vmatpush.msra.mxu0 %v1806
        %1876 = vmatpush.msra.mxu0 %v1803
        %1877 = vmatpush.msra.mxu0 %v1800
        %1878 = vmatpush.msra.mxu0 %v1797
        %1879 = vmatpush.msra.mxu0 %v1794
        %1880 = vmatpush.msra.mxu0 %v1791
        %1881 = vmatpush.msra.mxu0 %v1788
        %1882 = vmatpush.msra.mxu0 %v1785
        %1883 = vmatpush.msra.mxu0 %v1782
        %1884 = vmatpush.msra.mxu0 %v1779
        %1885 = vmatpush.msra.mxu0 %v1776
        %1886 = vmatpush.msra.mxu0 %v1773
        %1887 = vmatpush.msra.mxu0 %v1770
        %1888 = vmatpush.msra.mxu0 %v1767
        %1889 = vmatmul.f32.gmra.mxu0 %v1828
        %v1890 = vpop.f32.mrf.mxu0
        %v1891 = vadd.f32 %v1826, %v1890
        %1892 = vdwg.mxu0
        %1893 = vmatpush.msra.mxu0 0.0
        %1894 = vmatpush.msra.mxu0 0.0
        %1895 = vmatpush.msra.mxu0 0.0
        %1896 = vmatpush.msra.mxu0 0.0
        %1897 = vmatpush.msra.mxu0 0.0
        %1898 = vmatpush.msra.mxu0 0.0
        %1899 = vmatpush.msra.mxu0 0.0
        %1900 = vmatpush.msra.mxu0 0.0
        %1901 = vmatpush.msra.mxu0 0.0
        %1902 = vmatpush.msra.mxu0 0.0
        %1903 = vmatpush.msra.mxu0 0.0
        %1904 = vmatpush.msra.mxu0 0.0
        %1905 = vmatpush.msra.mxu0 0.0
        %1906 = vmatpush.msra.mxu0 0.0
        %1907 = vmatpush.msra.mxu0 %v1818
        %1908 = vmatpush.msra.mxu0 %v1815
        %1909 = vmatmul.f32.gmra.mxu0 %v1831
        %v1910 = vpop.f32.mrf.mxu0
        %v1911 = vadd.f32 %v1891, %v1910
        %1912 = vdwg.mxu0
        %1913 = vmatpush.msra.mxu0 %v1813
        %1914 = vmatpush.msra.mxu0 %v1810
        %1915 = vmatpush.msra.mxu0 %v1807
        %1916 = vmatpush.msra.mxu0 %v1804
        %1917 = vmatpush.msra.mxu0 %v1801
        %1918 = vmatpush.msra.mxu0 %v1798
        %1919 = vmatpush.msra.mxu0 %v1795
        %1920 = vmatpush.msra.mxu0 %v1792
        %1921 = vmatpush.msra.mxu0 %v1789
        %1922 = vmatpush.msra.mxu0 %v1786
        %1923 = vmatpush.msra.mxu0 %v1783
        %1924 = vmatpush.msra.mxu0 %v1780
        %1925 = vmatpush.msra.mxu0 %v1777
        %1926 = vmatpush.msra.mxu0 %v1774
        %1927 = vmatpush.msra.mxu0 %v1771
        %1928 = vmatpush.msra.mxu0 %v1768
        %1929 = vmatmul.f32.gmra.mxu0 %v1828
        %v1930 = vpop.f32.mrf.mxu0
        %v1931 = vadd.f32 %v1826, %v1930
        %1932 = vdwg.mxu0
        %1933 = vmatpush.msra.mxu0 0.0
        %1934 = vmatpush.msra.mxu0 0.0
        %1935 = vmatpush.msra.mxu0 0.0
        %1936 = vmatpush.msra.mxu0 0.0
        %1937 = vmatpush.msra.mxu0 0.0
        %1938 = vmatpush.msra.mxu0 0.0
        %1939 = vmatpush.msra.mxu0 0.0
        %1940 = vmatpush.msra.mxu0 0.0
        %1941 = vmatpush.msra.mxu0 0.0
        %1942 = vmatpush.msra.mxu0 0.0
        %1943 = vmatpush.msra.mxu0 0.0
        %1944 = vmatpush.msra.mxu0 0.0
        %1945 = vmatpush.msra.mxu0 0.0
        %1946 = vmatpush.msra.mxu0 0.0
        %1947 = vmatpush.msra.mxu0 %v1819
        %1948 = vmatpush.msra.mxu0 %v1816
        %1949 = vmatmul.f32.gmra.mxu0 %v1831
        %v1950 = vpop.f32.mrf.mxu0
        %v1951 = vadd.f32 %v1931, %v1950
        %1952 = vdwg.mxu0
        %v1953 = vsub.f32 0.0, %v1871
        %v1954 = vsub.f32 0.0, %v1911
        %v1955 = vsub.f32 0.0, %v1951
        %v1956 = vmul.f32 %v1953, 1.442695
        %v1957 = vpow.pop %v1956
        %v1958 = vmul.f32 %v1954, 1.442695
        %v1959 = vpow.pop %v1958
        %v1960 = vmul.f32 %v1955, 1.442695
        %v1961 = vpow.pop %v1960
        %v1962 = vadd.f32 %v1957, 1.0
        %v1963 = vadd.f32 %v1959, 1.0
        %v1964 = vadd.f32 %v1961, 1.0
        %v1965 = vrcp.pop %v1962
        %v1966 = vmul.f32 %v1962, %v1965
        %v1967 = vsub.f32 1.0, %v1966
        %v1968 = vmul.f32 %v1965, %v1967
        %v1969 = vadd.f32 %v1965, %v1968
        %vm1970 = vweird.f32 %v1962
        %vm1971 = vweird.f32 %v1965
        %vm1972 = vmor %vm1970, %vm1971
        %v1973 = vsel %vm1972, %v1965, %v1969
        %v1974 = vand.u32 2147483647, %v1962
        %vm1975 = vcmp.eq.f32.partialorder %v1974, 8.507059e+37
        %v1976 = vand.u32 %v1962, 2147483648
        %v1977 = vor.u32 1.1754944e-38, %v1976
        %v1978 = vsel %vm1975, %v1977, %v1973
        %v1979 = vrcp.pop %v1963
        %v1980 = vmul.f32 %v1963, %v1979
        %v1981 = vsub.f32 1.0, %v1980
        %v1982 = vmul.f32 %v1979, %v1981
        %v1983 = vadd.f32 %v1979, %v1982
        %vm1984 = vweird.f32 %v1963
        %vm1985 = vweird.f32 %v1979
        %vm1986 = vmor %vm1984, %vm1985
        %v1987 = vsel %vm1986, %v1979, %v1983
        %v1988 = vand.u32 2147483647, %v1963
        %vm1989 = vcmp.eq.f32.partialorder %v1988, 8.507059e+37
        %v1990 = vand.u32 %v1963, 2147483648
        %v1991 = vor.u32 1.1754944e-38, %v1990
        %v1992 = vsel %vm1989, %v1991, %v1987
        %v1993 = vrcp.pop %v1964
        %v1994 = vmul.f32 %v1964, %v1993
        %v1995 = vsub.f32 1.0, %v1994
        %v1996 = vmul.f32 %v1993, %v1995
        %v1997 = vadd.f32 %v1993, %v1996
        %vm1998 = vweird.f32 %v1964
        %vm1999 = vweird.f32 %v1993
        %vm2000 = vmor %vm1998, %vm1999
        %v2001 = vsel %vm2000, %v1993, %v1997
        %v2002 = vand.u32 2147483647, %v1964
        %vm2003 = vcmp.eq.f32.partialorder %v2002, 8.507059e+37
        %v2004 = vand.u32 %v1964, 2147483648
        %v2005 = vor.u32 1.1754944e-38, %v2004
        %v2006 = vsel %vm2003, %v2005, %v2001
        %v2010 = vrot.slane %v1992, 7
        %v2011 = vrot.slane %v2006, 6
        %vm2012 = vcmask 1040384
        %v2013 = vsel %vm2012, %v1978, %v2010
        %vm2014 = vcmask 1041408
        %v2015 = vsel %vm2014, %v2013, %v2011
        %v2017 = vlaneseq
        %vm2018 = vcmp.ge.s32.totalorder %v2017, 0
        %vm2019 = vcmp.lt.s32.totalorder %v2017, 384
        %vm2020 = vmand %vm2018, %vm2019
        %2021 = vst.msk [vmem:[%s342] sm:$0x7] %vm2020, %v2015
        %s2022 = sand.u32 %s209, 1
        %s2023 = scalar_lea.sflag [#allocation10], %s2022
        %s2024 = sand.u32 %s209, 1
        %s2025 = smul.addr %s2024, 3
        %s2026 = scalar_lea.vmem [#allocation13], %s2025
        // Predicated region
        $region61: #{tpu_custom_call.1} parent=51 // pred_check
          %p2027 = pneg %p219
        $region62: #{tpu_custom_call.1} parent=51 // pred_check_branch
          %2029 = sbr.rel (%p2027) target = $region64
        $region63: #{tpu_custom_call.1} parent=51 // pred_region
          %2031 = vsyncadd %s2023, 0
          %s2032 = smul.addr %s28, 3
          %s2033 = scalar_lea.hbm %s8, %s2032
          %s2035 = sshll.u32 %s2026, 4
          %s2036 = int_to_ptr.vmem [resolvable:$true] %s2035
          %s2037 = sshll.u32 %s2033, 4
          %s2038 = int_to_ptr.hbm [resolvable:$true] %s2037
          %2040 = dma.vmem_to_hbm [thread:$0]  %s2036, 48, %s2038, %s2023
        $region64: #{tpu_custom_call.1} parent=51 // pred_fallthru
          _
      $region52: #{tpu_custom_call.1} parent=5 // pred_fallthru
        _
      %p2041 = scmp.le.s32.totalorder 2, %s23
      // Predicated region
      $region65: #{tpu_custom_call.1} parent=5 // pred_check
        %p2042 = pneg %p2041
      $region66: #{tpu_custom_call.1} parent=5 // pred_check_branch
        %2044 = sbr.rel (%p2042) target = $region68
      $region67: #{tpu_custom_call.1} parent=5 // pred_region
        %s2045 = ssub.s32 %s23, 2
        // Predicated region
        $region69: #{tpu_custom_call.1} parent=67 // pred_check
          %p2046 = pneg %p225
        $region70: #{tpu_custom_call.1} parent=67 // pred_check_branch
          %2048 = sbr.rel (%p2046) target = $region72
        $region71: #{tpu_custom_call.1} parent=67 // pred_region
          %s2049 = sand.u32 %s210, 1
          %s2050 = scalar_lea.sflag [#allocation10], %s2049
          %s2051 = sand.u32 %s210, 1
          %s2052 = smul.addr %s2051, 3
          %s2053 = scalar_lea.vmem [#allocation13], %s2052
          %2055 = dma.done %s2050, 48
        $region72: #{tpu_custom_call.1} parent=67 // pred_fallthru
          _
      $region68: #{tpu_custom_call.1} parent=5 // pred_fallthru
        _
    $region6: #{tpu_custom_call.1} parent=1 // loop_footer
      %s27 = sadd.s32 1, %s23
    $region7: #{tpu_custom_call.1} parent=1 // loop_footer_branch
      %22 = sbr.rel target = $region3
    $region8: #{tpu_custom_call.1} parent=1 // loop_exit
      _
    %2056 = vsyncpa [#allocation9], 1
    %s2057 = scalar_lea.sflag [#allocation9], 1
    %2058 = vsyncpa %s2057, 1
    %2059 = vsyncpa [#allocation12], 1
    %2060 = vsyncpa [#allocation10], 1
    %s2061 = scalar_lea.sflag [#allocation10], 1
    %2062 = vsyncpa %s2061, 1

</llo_original>
